<compile_context>
chip_gen: v7x
topology: tpu7x:2x2x1
jax: 0.10.0
libtpu: 0.0.40
codegen_flags: <defaults>
</compile_context>

<pallas_src>
import functools

import jax
import jax.numpy as jnp
from jax.experimental import pallas as pl
from jax.experimental.pallas import tpu as pltpu


def _expand_shuffle_ln_kernel(x_ref, w_ref, gamma_ref, beta_ref, o_ref, *,
                              dim, eps, mxu_dtype, full_weight):
    """One grid step = one (batch b, row-block hb, sub-row p1) output slab.

    x_ref:     (th*W, dim)        input tokens (resident across the 4 p1 steps)
    w_ref:     (16*dim, dim)      full expand weight (full_weight=True)
               or (4*dim, dim)    this p1's output-channel block
    gamma_ref: (1, dim)           LayerNorm scale
    beta_ref:  (1, dim)           LayerNorm shift
    o_ref:     (th, W, 4*dim)     output slab out[b, h_block, p1, :, :]
    """
    th, W, g4 = o_ref.shape
    rows = th * W

    x_mat = x_ref[...].astype(mxu_dtype)                   # (rows, dim)

    if full_weight:
        p = pl.program_id(2)
        start = pl.multiple_of(p * g4, g4)                 # g4 is a multiple of 128
        wp = w_ref[pl.ds(start, g4), :]                    # (g4, dim)
    else:
        wp = w_ref[...]                                    # (g4, dim)
    wp = wp.astype(mxu_dtype)

    # MXU: x @ W_p1^T (PyTorch Linear keeps weight as (out, in)); f32 accumulate.
    y = jax.lax.dot_general(
        x_mat, wp,
        dimension_numbers=(((1,), (1,)), ((), ())),
        preferred_element_type=jnp.float32)                # (rows, g4)

    # Per-(p2) sub-pixel LayerNorm over `dim` channels, two-pass stats in f32.
    y3 = y.reshape(rows, 4, dim)
    mean = jnp.mean(y3, axis=-1, keepdims=True)
    d = y3 - mean
    var = jnp.mean(d * d, axis=-1, keepdims=True)
    rstd = jax.lax.rsqrt(var + eps)

    gamma = gamma_ref[...].reshape(1, 1, dim).astype(jnp.float32)
    beta = beta_ref[...].reshape(1, 1, dim).astype(jnp.float32)
    out = d * rstd * gamma + beta                          # (rows, 4, dim)

    # (rows, 4, dim) -> (th, W, 4*dim) is the fused pixel shuffle's final layout.
    o_ref[...] = out.reshape(th, W, g4).astype(o_ref.dtype)


def _physical_vmem_bytes():
    """Per-core VMEM capacity; conservative 64 MiB (v7x) fallback."""
    try:
        info = pltpu.get_tpu_info()
        for name in ("vmem_capacity_bytes", "vmem_size_bytes", "vmem_bytes"):
            v = getattr(info, name, None)
            if v:
                return int(v)
    except Exception:
        pass
    return 64 * 1024 * 1024


def _tile_vmem_bytes(rows, dim, g4, in_bytes, out_bytes, w_block_bytes):
    return (2 * rows * dim * in_bytes       # double-buffered input block
            + 2 * rows * g4 * out_bytes     # double-buffered output block
            + 4 * rows * g4 * 4             # f32 matmul result + LN/relayout temps
            + w_block_bytes                 # weight buffer(s)
            + 4 * 2 * dim * 4)              # gamma/beta (double-buffered)


def final_patch_expand_x4(x, w_expand, gamma, beta, *, input_resolution, dim,
                          eps=1e-5,
                          out_dtype=jnp.bfloat16,       # perf default (review)
                          mxu_dtype=jnp.bfloat16,       # perf default (review)
                          max_tile_rows=None,
                          vmem_budget_bytes=None,
                          min_parallel_blocks=2):
    """Pallas implementation of FinalPatchExpand_X4.forward.

    Args:
      x:         (B, H*W, dim) tokens.
      w_expand:  (16*dim, dim) PyTorch-convention Linear weight (out, in).
      gamma:     (dim,) LayerNorm weight.
      beta:      (dim,) LayerNorm bias.
    Returns:
      (B, 16*H*W, dim) tokens (matches the PyTorch module).
      Pass out_dtype=jnp.float32, mxu_dtype=jnp.float32 for exact-parity builds.
    """
    H, W = input_resolution
    B, L, C = x.shape
    assert L == H * W, "input feature has wrong size"
    assert C == dim
    # 4*dim output lanes must be 128-aligned.
    assert dim % 32 == 0, "dim must be a multiple of 32 for this kernel"

    g4 = 4 * dim
    out_dtype = jnp.dtype(x.dtype if out_dtype is None else out_dtype)
    mxu_dtype = jnp.dtype(x.dtype if mxu_dtype is None else mxu_dtype)

    in_bytes = jnp.dtype(x.dtype).itemsize
    out_bytes = out_dtype.itemsize
    w_bytes = mxu_dtype.itemsize

    # Chip-aware budgets (v5e/v6e: 128 MiB VMEM, v7x: 64 MiB per TC).
    vmem_cap = _physical_vmem_bytes()
    if vmem_budget_bytes is None:
        vmem_budget_bytes = int(vmem_cap * 0.70)
    if max_tile_rows is None:
        max_tile_rows = 2048 if vmem_cap >= 96 * 1024 * 1024 else 1024

    # Weight handling: grid-constant full-weight load when it fits comfortably
    # (one DMA for the whole grid), else per-p1 (4*dim, dim) blocks.
    full_w_bytes = 2 * 16 * dim * dim * w_bytes     # double-buffer allocation
    full_weight = full_w_bytes <= vmem_budget_bytes // 6
    w_block_bytes = full_w_bytes if full_weight else 2 * g4 * dim * w_bytes

    # Keep enough independent (b, h) blocks so both v7x TensorCores get work.
    min_row_blocks = max(1, -(-min_parallel_blocks // B))
    min_row_blocks = min(min_row_blocks, H)

    best_th = 1
    best_est = _tile_vmem_bytes(W, dim, g4, in_bytes, out_bytes, w_block_bytes)
    for th in range(1, H + 1):
        if H % th or (H // th) < min_row_blocks:
            continue
        rows = th * W
        if rows > max_tile_rows:
            continue
        if rows % 8 and th != H:    # keep sublane-aligned row blocks
            continue
        est = _tile_vmem_bytes(rows, dim, g4, in_bytes, out_bytes, w_block_bytes)
        if est <= vmem_budget_bytes and th > best_th:
            best_th, best_est = th, est
    th = best_th

    # VMEM limit derived from the chosen tile (+ headroom), capped by the chip.
    vmem_limit = int(min(vmem_cap, max(best_est + (8 << 20), 32 << 20)))

    w = w_expand.astype(mxu_dtype)            # keep (16*dim, dim): no host transpose
    gamma2 = gamma.reshape(1, dim)
    beta2 = beta.reshape(1, dim)

    if full_weight:
        w_spec = pl.BlockSpec((16 * dim, dim), lambda b, h, p: (0, 0))
    else:
        w_spec = pl.BlockSpec((g4, dim), lambda b, h, p: (p, 0))

    kernel = functools.partial(_expand_shuffle_ln_kernel, dim=dim, eps=eps,
                               mxu_dtype=mxu_dtype, full_weight=full_weight)

    n_out_tokens = B * 16 * L
    cost = pl.CostEstimate(
        flops=int(2 * B * L * dim * 16 * dim + 10 * n_out_tokens * dim),
        transcendentals=int(n_out_tokens),
        bytes_accessed=int(x.size * in_bytes + w.size * w_bytes
                           + (gamma2.size + beta2.size) * 4
                           + n_out_tokens * dim * out_bytes),
    )

    o = pl.pallas_call(
        kernel,
        out_shape=jax.ShapeDtypeStruct((B, H, 4, W, g4), out_dtype),
        grid_spec=pltpu.PrefetchScalarGridSpec(
            num_scalar_prefetch=0,
            grid=(B, H // th, 4),
            in_specs=[
                # Input rows: block index ignores p1, so the tile stays
                # resident (no re-DMA) across the 4 p1 steps.
                pl.BlockSpec((None, th * W, dim), lambda b, h, p: (b, h, 0)),
                # Expand weight: constant index map -> fetched once for the
                # whole grid (or per-p1 block when too large).
                w_spec,
                pl.BlockSpec((1, dim), lambda b, h, p: (0, 0)),
                pl.BlockSpec((1, dim), lambda b, h, p: (0, 0)),
            ],
            # Pixel shuffle fused here: each p1 step writes its own slab of the
            # (B, H, 4, W, 4*dim) output, already in 'b (h p1) (w p2) c' order.
            out_specs=pl.BlockSpec((None, th, None, W, g4),
                                   lambda b, h, p: (b, h, p, 0, 0)),
        ),
        compiler_params=pltpu.CompilerParams(
            dimension_semantics=("parallel", "parallel", "arbitrary"),
            vmem_limit_bytes=vmem_limit,
        ),
        cost_estimate=cost,
    )(x, w, gamma2, beta2)

    # (B, H, 4, W, 4*dim) -> (B, 16*H*W, dim) is a contiguous (free) reshape.
    return o.reshape(B, 16 * H * W, dim)


def _reference(x, w_expand, gamma, beta, *, input_resolution, dim, eps=1e-5):
    """Pure-JAX reference mirroring the PyTorch forward."""
    H, W = input_resolution
    B, L, C = x.shape
    y = x @ w_expand.T                                       # (B, L, 16*dim)
    y = y.reshape(B, H, W, 4, 4, dim)
    y = jnp.transpose(y, (0, 1, 3, 2, 4, 5)).reshape(B, -1, dim)
    mean = jnp.mean(y, axis=-1, keepdims=True)
    var = jnp.mean((y - mean) ** 2, axis=-1, keepdims=True)
    return (y - mean) * jax.lax.rsqrt(var + eps) * gamma + beta


if __name__ == "__main__":
    key = jax.random.PRNGKey(0)
    k_x, k_w, k_g, k_b = jax.random.split(key, 4)

    B = 2
    H = W = 8
    dim = 32
    input_resolution = (H, W)

    x = jax.random.normal(k_x, (B, H * W, dim), dtype=jnp.float32)
    # nn.Linear(dim, 16*dim, bias=False) -> weight shape (16*dim, dim)
    w_expand = 0.02 * jax.random.normal(k_w, (16 * dim, dim), dtype=jnp.float32)
    gamma = 1.0 + 0.1 * jax.random.normal(k_g, (dim,), dtype=jnp.float32)
    beta = 0.1 * jax.random.normal(k_b, (dim,), dtype=jnp.float32)

    out = final_patch_expand_x4(
        x, w_expand, gamma, beta,
        input_resolution=input_resolution, dim=dim)
    out = jax.block_until_ready(out)
    assert out.shape == (B, 16 * H * W, dim), out.shape
    assert out.dtype == jnp.bfloat16, out.dtype
    out_f32 = out.astype(jnp.float32)

    # Tight check against a reference fed the same bf16-rounded operands that
    # the perf path consumes (validates matmul block / shuffle / LN wiring).
    x_bf = x.astype(jnp.bfloat16).astype(jnp.float32)
    w_bf = w_expand.astype(jnp.bfloat16).astype(jnp.float32)
    ref_bf = _reference(x_bf, w_bf, gamma, beta,
                        input_resolution=input_resolution, dim=dim)
    err_bf = float(jnp.max(jnp.abs(out_f32 - ref_bf)))
    assert jnp.allclose(out_f32, ref_bf, atol=2.5e-2, rtol=2.5e-2), err_bf

    # Looser sanity check against the full-f32 reference (bf16 MXU + bf16 store).
    ref = _reference(x, w_expand, gamma, beta,
                     input_resolution=input_resolution, dim=dim)
    err = float(jnp.max(jnp.abs(out_f32 - ref)))
    assert jnp.allclose(out_f32, ref, atol=8e-2, rtol=8e-2), err

    print("KERNEL_OK")
</pallas_src>

<mosaic_0001>
module attributes {stable_mosaic.version = 11 : i64} {
  func.func @_expand_shuffle_ln_kernel(%arg0: i32, %arg1: i32, %arg2: i32, %arg3: memref<1x64x32xf32, #tpu.memory_space<vmem>>, %arg4: memref<512x32xbf16, #tpu.memory_space<vmem>>, %arg5: memref<1x32xf32, #tpu.memory_space<vmem>>, %arg6: memref<1x32xf32, #tpu.memory_space<vmem>>, %arg7: memref<1x8x1x8x128xbf16, #tpu.memory_space<vmem>>) attributes {dimension_semantics = [#tpu.dimension_semantics<parallel>, #tpu.dimension_semantics<parallel>, #tpu.dimension_semantics<arbitrary>], iteration_bounds = array<i64: 2, 1, 4>, scalar_prefetch = 0 : i64, scratch_operands = 0 : i64, tpu.core_type = #tpu.core_type<tc>, window_params = [{transform_indices = @transform_0, window_bounds = array<i64: 1, 64, 32>}, {pipeline_mode = #tpu.pipeline_mode<synchronous>, transform_indices = @transform_1, window_bounds = array<i64: 512, 32>}, {pipeline_mode = #tpu.pipeline_mode<synchronous>, transform_indices = @transform_2, window_bounds = array<i64: 1, 32>}, {pipeline_mode = #tpu.pipeline_mode<synchronous>, transform_indices = @transform_3, window_bounds = array<i64: 1, 32>}, {transform_indices = @transform_4, window_bounds = array<i64: 1, 8, 1, 8, 128>}]} {
    %c0 = arith.constant 0 : index
    %c0_0 = arith.constant 0 : index
    %c0_1 = arith.constant 0 : index
    %0 = vector.load %arg3[%c0, %c0_0, %c0_1] : memref<1x64x32xf32, #tpu.memory_space<vmem>>, vector<1x64x32xf32>
    %1 = vector.shape_cast %0 : vector<1x64x32xf32> to vector<64x32xf32>
    %2 = arith.truncf %1 : vector<64x32xf32> to vector<64x32xbf16>
    %c128_i32 = arith.constant 128 : i32
    %3 = arith.muli %arg2, %c128_i32 : i32
    %4 = tpu.assume_multiple %3, 128 : i32
    %5 = arith.index_cast %4 : i32 to index
    %c0_2 = arith.constant 0 : index
    %6 = vector.load %arg4[%5, %c0_2] : memref<512x32xbf16, #tpu.memory_space<vmem>>, vector<128x32xbf16>
    %cst = arith.constant dense<0.000000e+00> : vector<64x128xf32>
    %7 = tpu.matmul %2, %6, %cst {dimension_numbers = #tpu.dot_dimension_numbers<[1], [1], [0], [0], [0, 0, 1, 0], [], []>} : vector<64x32xbf16>, vector<128x32xbf16>, vector<64x128xf32> -> vector<64x128xf32>
    %8 = vector.shape_cast %7 : vector<64x128xf32> to vector<64x4x32xf32>
    %cst_3 = arith.constant dense<0.000000e+00> : vector<64x4xf32>
    %9 = vector.multi_reduction <add>, %8, %cst_3 [2] : vector<64x4x32xf32> to vector<64x4xf32>
    %10 = vector.shape_cast %9 : vector<64x4xf32> to vector<64x4x1xf32>
    %cst_4 = arith.constant 3.200000e+01 : f32
    %11 = vector.broadcast %cst_4 : f32 to vector<64x4x1xf32>
    %12 = arith.divf %10, %11 : vector<64x4x1xf32>
    %13 = vector.broadcast %12 : vector<64x4x1xf32> to vector<64x4x32xf32>
    %14 = arith.subf %8, %13 : vector<64x4x32xf32>
    %15 = arith.mulf %14, %14 : vector<64x4x32xf32>
    %cst_5 = arith.constant dense<0.000000e+00> : vector<64x4xf32>
    %16 = vector.multi_reduction <add>, %15, %cst_5 [2] : vector<64x4x32xf32> to vector<64x4xf32>
    %17 = vector.shape_cast %16 : vector<64x4xf32> to vector<64x4x1xf32>
    %cst_6 = arith.constant 3.200000e+01 : f32
    %18 = vector.broadcast %cst_6 : f32 to vector<64x4x1xf32>
    %19 = arith.divf %17, %18 : vector<64x4x1xf32>
    %cst_7 = arith.constant 9.99999974E-6 : f32
    %20 = vector.broadcast %cst_7 : f32 to vector<64x4x1xf32>
    %21 = arith.addf %19, %20 : vector<64x4x1xf32>
    %22 = math.rsqrt %21 : vector<64x4x1xf32>
    %c0_8 = arith.constant 0 : index
    %c0_9 = arith.constant 0 : index
    %23 = vector.load %arg5[%c0_8, %c0_9] : memref<1x32xf32, #tpu.memory_space<vmem>>, vector<1x32xf32>
    %24 = vector.shape_cast %23 : vector<1x32xf32> to vector<1x1x32xf32>
    %c0_10 = arith.constant 0 : index
    %c0_11 = arith.constant 0 : index
    %25 = vector.load %arg6[%c0_10, %c0_11] : memref<1x32xf32, #tpu.memory_space<vmem>>, vector<1x32xf32>
    %26 = vector.shape_cast %25 : vector<1x32xf32> to vector<1x1x32xf32>
    %27 = vector.broadcast %22 : vector<64x4x1xf32> to vector<64x4x32xf32>
    %28 = arith.mulf %14, %27 : vector<64x4x32xf32>
    %29 = vector.broadcast %24 : vector<1x1x32xf32> to vector<64x4x32xf32>
    %30 = arith.mulf %28, %29 : vector<64x4x32xf32>
    %31 = vector.broadcast %26 : vector<1x1x32xf32> to vector<64x4x32xf32>
    %32 = arith.addf %30, %31 : vector<64x4x32xf32>
    %33 = vector.shape_cast %32 : vector<64x4x32xf32> to vector<8x8x128xf32>
    %34 = arith.truncf %33 : vector<8x8x128xf32> to vector<8x8x128xbf16>
    %c0_12 = arith.constant 0 : index
    %c0_13 = arith.constant 0 : index
    %c0_14 = arith.constant 0 : index
    %c0_15 = arith.constant 0 : index
    %c0_16 = arith.constant 0 : index
    %35 = vector.load %arg7[%c0_12, %c0_13, %c0_14, %c0_15, %c0_16] : memref<1x8x1x8x128xbf16, #tpu.memory_space<vmem>>, vector<1x8x1x8x128xbf16>
    %36 = vector.shape_cast %35 : vector<1x8x1x8x128xbf16> to vector<8x8x128xbf16>
    %37 = vector.shape_cast %34 : vector<8x8x128xbf16> to vector<1x8x1x8x128xbf16>
    tpu.vector_store %arg7[%c0_12, %c0_13, %c0_14, %c0_15, %c0_16], %37 {strides = array<i32>} : memref<1x8x1x8x128xbf16, #tpu.memory_space<vmem>>, vector<1x8x1x8x128xbf16>,
    return
  }
  func.func @transform_0(%arg0: i32, %arg1: i32, %arg2: i32) -> (i32, i32, i32) {
    %c0_i32 = arith.constant 0 : i32
    %c0_i32_0 = arith.constant 0 : i32
    return %arg0, %arg1, %c0_i32 : i32, i32, i32
  }
  func.func @transform_1(%arg0: i32, %arg1: i32, %arg2: i32) -> (i32, i32) {
    %c0_i32 = arith.constant 0 : i32
    %c0_i32_0 = arith.constant 0 : i32
    %c0_i32_1 = arith.constant 0 : i32
    return %c0_i32, %c0_i32_0 : i32, i32
  }
  func.func @transform_2(%arg0: i32, %arg1: i32, %arg2: i32) -> (i32, i32) {
    %c0_i32 = arith.constant 0 : i32
    %c0_i32_0 = arith.constant 0 : i32
    %c0_i32_1 = arith.constant 0 : i32
    return %c0_i32, %c0_i32_0 : i32, i32
  }
  func.func @transform_3(%arg0: i32, %arg1: i32, %arg2: i32) -> (i32, i32) {
    %c0_i32 = arith.constant 0 : i32
    %c0_i32_0 = arith.constant 0 : i32
    %c0_i32_1 = arith.constant 0 : i32
    return %c0_i32, %c0_i32_0 : i32, i32
  }
  func.func @transform_4(%arg0: i32, %arg1: i32, %arg2: i32) -> (i32, i32, i32, i32, i32) {
    %c0_i32 = arith.constant 0 : i32
    %c0_i32_0 = arith.constant 0 : i32
    %c0_i32_1 = arith.constant 0 : i32
    return %arg0, %arg1, %arg2, %c0_i32, %c0_i32_0 : i32, i32, i32, i32, i32
  }
}

</mosaic_0001>

<llo_original>
// kernel: tpu_custom_call.1
$region0: #{tpu_custom_call.1}
  #allocation0 [shape = 'u32[]', space=smem, size = 0x4, offset = 0x4, fixed_abs, tag = 'smem constant byte address 0x4 - core index']
  #allocation1 [shape = 'u32[144,128]{1,0:T(1,128)}', space=vmem, size = 0x12000, scoped, tag = 'internal scratch']
  %s0 = inlined_call_operand.vmem [shape: f32[2,64,32], index: 0, kind: input, shape index: {}]
  %s1 = inlined_call_operand.vmem [shape: bf16[512,32], index: 1, kind: input, shape index: {}]
  %s2 = inlined_call_operand.vmem [shape: f32[1,32], index: 2, kind: input, shape index: {}]
  %s3 = inlined_call_operand.vmem [shape: f32[1,32], index: 3, kind: input, shape index: {}]
  %s4 = inlined_call_operand.hbm [shape: bf16[2,8,4,8,128], index: 4, kind: output, shape index: {}]
  %s5 = sld [smem:[#allocation0]]
  $region49: #{tpu_custom_call.1} parent=0
    _
  %s7 = ssub.s32 1, %s5
  %s8 = scalar_select 0, %s7, %s5
  $region1: #{tpu_custom_call.1} parent=0
    #allocation2 [shape = 'u8[32768]{0}', space=vmem, size = 0x8000, scoped, tag = 'output window, operand 0']
    #allocation3 [shape = 's32[2]{0}', space=sflag, size = 0x8, scoped, tag = 'scoped memory for tpu_custom_call.1']
    %9 = vsyncpa [#allocation3], 0
    %s10 = scalar_lea.sflag [#allocation3], 1
    %11 = vsyncpa %s10, 0
    loop: start=0, step=1, limit=10
    $region2: #{tpu_custom_call.1} parent=1 // loop_pre_header
      _
    $region3: #{tpu_custom_call.1} parent=1 // loop_header
      %s13 = sphi 0, %s17
      %p14 = scmp.ge.s32.totalorder %s13, 10
      %s20 = sphi 0, %s39
      %s21 = sphi 0, %s35
      %s22 = sphi 0, %s31
      %s23 = sphi 0, %s20
      %s24 = sphi 0, %s21
      %s25 = sphi 0, %s22
      %s26 = sphi 0, %s23
      %s27 = sphi 0, %s24
      %s28 = sphi 0, %s25
      %s44 = sphi 0, %s46
      %s47 = sphi 0, %s44
      %s48 = sphi 0, %s47
      %s64 = sphi 0, %s48
      %s68 = sphi 0, %s68
      %s70 = sphi 0, %s68
      %s71 = sphi 0, %s70
      %s85 = sphi 0, %s71
      %s89 = sphi 0, %s89
      %s91 = sphi 0, %s89
      %s92 = sphi 0, %s91
      %s106 = sphi 0, %s92
      %s110 = sphi 0, %s110
      %s112 = sphi 0, %s110
      %s113 = sphi 0, %s112
      %s127 = sphi 0, %s113
      %s137 = sphi 0, %s139
      %s140 = sphi 0, %s137
      %s141 = sphi 0, %s140
      %s157 = sphi 0, %s141
    $region4: #{tpu_custom_call.1} parent=1 // loop_header_branch
      %16 = sbr.rel (%p14) target = $region8
    $region5: #{tpu_custom_call.1} parent=1 // loop_body
      %s18 = ssub.s32 %s13, 1
      %s19 = ssub.s32 %s13, 2
      %s29 = sadd.s32 1, %s22
      %p30 = scmp.ge.s32.totalorder %s29, 4
      %s31 = scalar_select %p30, 0, %s29
      %s32 = sadd.s32 1, %s21
      %s33 = scalar_select %p30, %s32, %s21
      %p34 = scmp.ge.s32.totalorder %s33, 1
      %s35 = scalar_select %p34, 0, %s33
      %s36 = sadd.s32 1, %s20
      %s37 = scalar_select %p34, %s36, %s20
      %p38 = scmp.ge.s32.totalorder %s37, 2
      %s39 = scalar_select %p38, 0, %s37
      %s40 = ssub.s32 %s20, %s39
      %s41 = ssub.s32 %s21, %s35
      %s42 = sor.u32 %s40, %s41
      %p43 = scmp.eq.s32.totalorder %s42, 0
      %s45 = sadd.s32 %s44, 1
      %s46 = scalar_select %p43, %s44, %s45
      %p49 = pneg %p43
      %p50 = scmp.eq.s32.totalorder %s13, 7
      %p51 = por %p49, %p50
      %p52 = scmp.ne.s32.totalorder %s44, %s47
      %p53 = scmp.eq.s32.totalorder %s13, 0
      %p54 = por %p52, %p53
      %p55 = scmp.ne.s32.totalorder %s44, %s47
      %p56 = scmp.eq.s32.totalorder %s18, 7
      %p57 = por %p55, %p56
      %p58 = scmp.ne.s32.totalorder %s47, %s48
      %p59 = scmp.eq.s32.totalorder %s18, 0
      %p60 = por %p58, %p59
      %p61 = scmp.ne.s32.totalorder %s47, %s48
      %p62 = scmp.eq.s32.totalorder %s19, 7
      %p63 = por %p61, %p62
      %p65 = scmp.ne.s32.totalorder %s48, %s64
      %p66 = scmp.eq.s32.totalorder %s19, 0
      %p67 = por %p65, %p66
      %s69 = sadd.s32 %s68, 1
      %p72 = scmp.eq.s32.totalorder %s13, 7
      %p73 = scmp.ne.s32.totalorder %s68, %s70
      %p74 = scmp.eq.s32.totalorder %s13, 0
      %p75 = por %p73, %p74
      %p76 = scmp.ne.s32.totalorder %s68, %s70
      %p77 = scmp.eq.s32.totalorder %s18, 7
      %p78 = por %p76, %p77
      %p79 = scmp.ne.s32.totalorder %s70, %s71
      %p80 = scmp.eq.s32.totalorder %s18, 0
      %p81 = por %p79, %p80
      %p82 = scmp.ne.s32.totalorder %s70, %s71
      %p83 = scmp.eq.s32.totalorder %s19, 7
      %p84 = por %p82, %p83
      %p86 = scmp.ne.s32.totalorder %s71, %s85
      %p87 = scmp.eq.s32.totalorder %s19, 0
      %p88 = por %p86, %p87
      %s90 = sadd.s32 %s89, 1
      %p93 = scmp.eq.s32.totalorder %s13, 7
      %p94 = scmp.ne.s32.totalorder %s89, %s91
      %p95 = scmp.eq.s32.totalorder %s13, 0
      %p96 = por %p94, %p95
      %p97 = scmp.ne.s32.totalorder %s89, %s91
      %p98 = scmp.eq.s32.totalorder %s18, 7
      %p99 = por %p97, %p98
      %p100 = scmp.ne.s32.totalorder %s91, %s92
      %p101 = scmp.eq.s32.totalorder %s18, 0
      %p102 = por %p100, %p101
      %p103 = scmp.ne.s32.totalorder %s91, %s92
      %p104 = scmp.eq.s32.totalorder %s19, 7
      %p105 = por %p103, %p104
      %p107 = scmp.ne.s32.totalorder %s92, %s106
      %p108 = scmp.eq.s32.totalorder %s19, 0
      %p109 = por %p107, %p108
      %s111 = sadd.s32 %s110, 1
      %p114 = scmp.eq.s32.totalorder %s13, 7
      %p115 = scmp.ne.s32.totalorder %s110, %s112
      %p116 = scmp.eq.s32.totalorder %s13, 0
      %p117 = por %p115, %p116
      %p118 = scmp.ne.s32.totalorder %s110, %s112
      %p119 = scmp.eq.s32.totalorder %s18, 7
      %p120 = por %p118, %p119
      %p121 = scmp.ne.s32.totalorder %s112, %s113
      %p122 = scmp.eq.s32.totalorder %s18, 0
      %p123 = por %p121, %p122
      %p124 = scmp.ne.s32.totalorder %s112, %s113
      %p125 = scmp.eq.s32.totalorder %s19, 7
      %p126 = por %p124, %p125
      %p128 = scmp.ne.s32.totalorder %s113, %s127
      %p129 = scmp.eq.s32.totalorder %s19, 0
      %p130 = por %p128, %p129
      %s131 = ssub.s32 %s20, %s39
      %s132 = ssub.s32 %s21, %s35
      %s133 = sor.u32 %s131, %s132
      %s134 = ssub.s32 %s22, %s31
      %s135 = sor.u32 %s133, %s134
      %p136 = scmp.eq.s32.totalorder %s135, 0
      %s138 = sadd.s32 %s137, 1
      %s139 = scalar_select %p136, %s137, %s138
      %p142 = pneg %p136
      %p143 = scmp.eq.s32.totalorder %s13, 7
      %p144 = por %p142, %p143
      %p145 = scmp.ne.s32.totalorder %s137, %s140
      %p146 = scmp.eq.s32.totalorder %s13, 0
      %p147 = por %p145, %p146
      %p148 = scmp.ne.s32.totalorder %s137, %s140
      %p149 = scmp.eq.s32.totalorder %s18, 7
      %p150 = por %p148, %p149
      %p151 = scmp.ne.s32.totalorder %s140, %s141
      %p152 = scmp.eq.s32.totalorder %s18, 0
      %p153 = por %p151, %p152
      %p154 = scmp.ne.s32.totalorder %s140, %s141
      %p155 = scmp.eq.s32.totalorder %s19, 7
      %p156 = por %p154, %p155
      %p158 = scmp.ne.s32.totalorder %s141, %s157
      %p159 = scmp.eq.s32.totalorder %s19, 0
      %p160 = por %p158, %p159
      %p161 = scmp.le.s32.totalorder 1, %s13
      %p162 = scmp.lt.s32.totalorder %s13, 9
      %p163 = pnand %p161, %p162
      %p164 = pneg %p163
      // Predicated region
      $region9: #{tpu_custom_call.1} parent=5 // pred_check
        _
      $region10: #{tpu_custom_call.1} parent=5 // pred_check_branch
        %166 = sbr.rel (%p163) target = $region12
      $region11: #{tpu_custom_call.1} parent=5 // pred_region
        %s167 = ssub.s32 %s13, 1
        // Predicated region
        $region13: #{tpu_custom_call.1} parent=11 // pred_check
          %p168 = pneg %p81
        $region14: #{tpu_custom_call.1} parent=11 // pred_check_branch
          %170 = sbr.rel (%p168) target = $region16
        $region15: #{tpu_custom_call.1} parent=11 // pred_region
          _
        $region16: #{tpu_custom_call.1} parent=11 // pred_fallthru
          _
        // Predicated region
        $region17: #{tpu_custom_call.1} parent=11 // pred_check
          %p171 = pneg %p102
        $region18: #{tpu_custom_call.1} parent=11 // pred_check_branch
          %173 = sbr.rel (%p171) target = $region20
        $region19: #{tpu_custom_call.1} parent=11 // pred_region
          _
        $region20: #{tpu_custom_call.1} parent=11 // pred_fallthru
          _
        // Predicated region
        $region21: #{tpu_custom_call.1} parent=11 // pred_check
          %p174 = pneg %p123
        $region22: #{tpu_custom_call.1} parent=11 // pred_check_branch
          %176 = sbr.rel (%p174) target = $region24
        $region23: #{tpu_custom_call.1} parent=11 // pred_region
          _
        $region24: #{tpu_custom_call.1} parent=11 // pred_fallthru
          _
      $region12: #{tpu_custom_call.1} parent=5 // pred_fallthru
        _
      %p177 = scmp.lt.s32.totalorder %s13, 8
      // Predicated region
      $region25: #{tpu_custom_call.1} parent=5 // pred_check
        %p178 = pneg %p177
      $region26: #{tpu_custom_call.1} parent=5 // pred_check_branch
        %180 = sbr.rel (%p178) target = $region28
      $region27: #{tpu_custom_call.1} parent=5 // pred_region
        // Predicated region
        $region29: #{tpu_custom_call.1} parent=27 // pred_check
          %p181 = pneg %p54
        $region30: #{tpu_custom_call.1} parent=27 // pred_check_branch
          %183 = sbr.rel (%p181) target = $region32
        $region31: #{tpu_custom_call.1} parent=27 // pred_region
          %s184 = smul.u32 8, %s21
          %p185 = scmp.lt.s32.totalorder %s20, 1
          %s186 = scalar_select %p185, %s20, 1
          %p187 = scmp.lt.s32.totalorder %s184, 7
          %s188 = scalar_select %p187, %s184, 7
          %s189 = smul.addr %s186, 8
          %s190 = sadd.s32 %s188, %s189
          %s191 = smul.addr %s190, 8
          %s192 = scalar_lea.vmem %s0, %s191
          %s193 = smul.u32 8, %s21
        $region32: #{tpu_custom_call.1} parent=27 // pred_fallthru
          _
      $region28: #{tpu_custom_call.1} parent=5 // pred_fallthru
        _
      %p194 = scmp.le.s32.totalorder 1, %s13
      %p195 = scmp.lt.s32.totalorder %s13, 9
      %p196 = pnand %p194, %p195
      %p197 = pneg %p196
      // Predicated region
      $region33: #{tpu_custom_call.1} parent=5 // pred_check
        _
      $region34: #{tpu_custom_call.1} parent=5 // pred_check_branch
        %199 = sbr.rel (%p196) target = $region36
      $region35: #{tpu_custom_call.1} parent=5 // pred_region
        %s200 = ssub.s32 %s13, 1
        %s201 = smul.u32 8, %s24
        %p202 = scmp.lt.s32.totalorder %s23, 1
        %s203 = scalar_select %p202, %s23, 1
        %p204 = scmp.lt.s32.totalorder %s201, 7
        %s205 = scalar_select %p204, %s201, 7
        %s206 = smul.addr %s203, 8
        %s207 = sadd.s32 %s205, %s206
        %s208 = smul.addr %s207, 8
        %s209 = scalar_lea.vmem %s0, %s208
        %p210 = pneg %p60
        %p211 = pneg %p57
        %p212 = pneg %p81
        %p213 = pneg %p78
        %p214 = pneg %p102
        %p215 = pneg %p99
        %p216 = pneg %p123
        %p217 = pneg %p120
        %p218 = pneg %p153
        %p219 = pneg %p150
        %s220 = sand.u32 %s140, 1
        %s221 = scalar_lea.sflag [#allocation3], %s220
        %s222 = sand.u32 %s140, 1
        %s223 = smul.addr %s222, 32
        %s224 = scalar_lea.vmem [#allocation2], %s223
        %s225 = smul.u32 8, %s24
        %p226 = scmp.lt.s32.totalorder %s23, 1
        %s227 = scalar_select %p226, %s23, 1
        %p228 = scmp.lt.s32.totalorder %s225, 7
        %s229 = scalar_select %p228, %s225, 7
        %s230 = smul.addr %s227, 8
        %s231 = sadd.s32 %s229, %s230
        %s232 = smul.addr %s231, 8
        %s233 = scalar_lea.vmem %s0, %s232
        %s234 = smul.u32 8, %s24
        %s235 = smul.u32 8, %s24
        %v237 = vld [vmem:[%s233] sm:$0xff]
        %v238 = vld [vmem:[%s233 + $0x8] sm:$0xff]
        %v239 = vld [vmem:[%s233 + $0x10] sm:$0xff]
        %v240 = vld [vmem:[%s233 + $0x18] sm:$0xff]
        %v241 = vld [vmem:[%s233 + $0x20] sm:$0xff]
        %v242 = vld [vmem:[%s233 + $0x28] sm:$0xff]
        %v243 = vld [vmem:[%s233 + $0x30] sm:$0xff]
        %v244 = vld [vmem:[%s233 + $0x38] sm:$0xff]
        %v245 = vpack.c.bf16 %v238, %v237
        %v246 = vpack.c.bf16 %v240, %v239
        %v247 = vpack.c.bf16 %v242, %v241
        %v248 = vpack.c.bf16 %v244, %v243
        %s249 = smul.u32 %s25, 128
        %s250 = sshra.s32 %s249, 3
        %s251 = sand.u32 %s249, 7
        %s252 = smul.addr %s250, 4
        %s253 = scalar_lea.vmem %s1, %s252
        %v254 = vld [vmem:[%s253] sm:$0xf]
        %v255 = vld [vmem:[%s253 + $0x4] sm:$0xf]
        %v256 = vld [vmem:[%s253 + $0x8] sm:$0xf]
        %v257 = vld [vmem:[%s253 + $0xc] sm:$0xf]
        %v258 = vld [vmem:[%s253 + $0x10] sm:$0xf]
        %v259 = vld [vmem:[%s253 + $0x14] sm:$0xf]
        %v260 = vld [vmem:[%s253 + $0x18] sm:$0xf]
        %v261 = vld [vmem:[%s253 + $0x1c] sm:$0xf]
        %v262 = vld [vmem:[%s253 + $0x20] sm:$0xf]
        %v263 = vld [vmem:[%s253 + $0x24] sm:$0xf]
        %v264 = vld [vmem:[%s253 + $0x28] sm:$0xf]
        %v265 = vld [vmem:[%s253 + $0x2c] sm:$0xf]
        %v266 = vld [vmem:[%s253 + $0x30] sm:$0xf]
        %v267 = vld [vmem:[%s253 + $0x34] sm:$0xf]
        %v268 = vld [vmem:[%s253 + $0x38] sm:$0xf]
        %v269 = vld [vmem:[%s253 + $0x3c] sm:$0xf]
        %v286 = vunpack.c.l.b16 %v254
        %v287 = vunpack.c.l.b16 %v255
        %v288 = vunpack.c.l.b16 %v256
        %v289 = vunpack.c.l.b16 %v257
        %v290 = vunpack.c.l.b16 %v258
        %v291 = vunpack.c.l.b16 %v259
        %v292 = vunpack.c.l.b16 %v260
        %v293 = vunpack.c.l.b16 %v261
        %v294 = vunpack.c.l.b16 %v262
        %v295 = vunpack.c.l.b16 %v263
        %v296 = vunpack.c.l.b16 %v264
        %v297 = vunpack.c.l.b16 %v265
        %v298 = vunpack.c.l.b16 %v266
        %v299 = vunpack.c.l.b16 %v267
        %v300 = vunpack.c.l.b16 %v268
        %v301 = vunpack.c.l.b16 %v269
        %v302 = vpack.c.b16 %v287, %v286
        %v303 = vpack.c.b16 %v289, %v288
        %v304 = vpack.c.b16 %v291, %v290
        %v305 = vpack.c.b16 %v293, %v292
        %v306 = vpack.c.b16 %v295, %v294
        %v307 = vpack.c.b16 %v297, %v296
        %v308 = vpack.c.b16 %v299, %v298
        %v309 = vpack.c.b16 %v301, %v300
        %vm310 = vcmask 261120
        %v312 = vsel %vm310, %v245, 0
        %v315 = vsel %vm310, %v246, 0
        %v318 = vsel %vm310, %v247, 0
        %v321 = vsel %vm310, %v248, 0
        %v324 = vsel %vm310, %v302, 0
        %v327 = vsel %vm310, %v303, 0
        %v330 = vsel %vm310, %v304, 0
        %v333 = vsel %vm310, %v305, 0
        %v336 = vsel %vm310, %v306, 0
        %v339 = vsel %vm310, %v307, 0
        %v342 = vsel %vm310, %v308, 0
        %v345 = vsel %vm310, %v309, 0
        %347 = vmatprep.subr.bf16.mxu0 0
        %348 = vmatpush1.bf16.xpose.msra.mxu0 %v324
        %349 = vmatprep.subr.bf16.mxu0 0
        %350 = vmatpush1.bf16.xpose.msra.mxu0 %v327
        %351 = vmatprep.subr.bf16.mxu0 0
        %352 = vmatpush1.bf16.xpose.msra.mxu0 %v330
        %353 = vmatprep.subr.bf16.mxu0 0
        %354 = vmatpush1.bf16.xpose.msra.mxu0 %v333
        %355 = vmatprep.subr.bf16.mxu0 0
        %356 = vmatpush1.bf16.xpose.msra.mxu0 %v336
        %357 = vmatprep.subr.bf16.mxu0 0
        %358 = vmatpush1.bf16.xpose.msra.mxu0 %v339
        %359 = vmatprep.subr.bf16.mxu0 0
        %360 = vmatpush1.bf16.xpose.msra.mxu0 %v342
        %361 = vmatprep.subr.bf16.mxu0 0
        %362 = vmatpush1.bf16.xpose.msra.mxu0 %v345
        %363 = vmatprep.subr.bf16.mxu0 0
        %364 = vmatpush1.bf16.xpose.msra.mxu0 0
        %365 = vmatprep.subr.bf16.mxu0 0
        %366 = vmatpush1.bf16.xpose.msra.mxu0 0
        %367 = vmatprep.subr.bf16.mxu0 0
        %368 = vmatpush1.bf16.xpose.msra.mxu0 0
        %369 = vmatprep.subr.bf16.mxu0 0
        %370 = vmatpush1.bf16.xpose.msra.mxu0 0
        %371 = vmatprep.subr.bf16.mxu0 0
        %372 = vmatpush1.bf16.xpose.msra.mxu0 0
        %373 = vmatprep.subr.bf16.mxu0 0
        %374 = vmatpush1.bf16.xpose.msra.mxu0 0
        %375 = vmatprep.subr.bf16.mxu0 0
        %376 = vmatpush1.bf16.xpose.msra.mxu0 0
        %377 = vmatprep.subr.bf16.mxu0 0
        %378 = vmatpush1.bf16.xpose.msra.mxu0 0
        %379 = vmatprep.mubr.bf16.mxu0 0
        %380 = vmatmul.mubr.bf16.gmra.mrb[0].mxu0 %v312
        %v381 = vpop.f32.mrb[0].mxu0
        %v382 = vadd.f32 0.0, %v381
        %v383 = vpop.f32.mrb[0].mxu0
        %v384 = vpop.f32.mrb[0].mxu0
        %v385 = vadd.f32 0.0, %v384
        %v386 = vpop.f32.mrb[0].mxu0
        %387 = vmatprep.mubr.bf16.mxu0 0
        %388 = vmatmul.mubr.bf16.gmra.mrb[0].mxu0 %v315
        %v389 = vpop.f32.mrb[0].mxu0
        %v390 = vadd.f32 0.0, %v389
        %v391 = vpop.f32.mrb[0].mxu0
        %v392 = vpop.f32.mrb[0].mxu0
        %v393 = vadd.f32 0.0, %v392
        %v394 = vpop.f32.mrb[0].mxu0
        %395 = vmatprep.mubr.bf16.mxu0 0
        %396 = vmatmul.mubr.bf16.gmra.mrb[0].mxu0 %v318
        %v397 = vpop.f32.mrb[0].mxu0
        %v398 = vadd.f32 0.0, %v397
        %v399 = vpop.f32.mrb[0].mxu0
        %v400 = vpop.f32.mrb[0].mxu0
        %v401 = vadd.f32 0.0, %v400
        %v402 = vpop.f32.mrb[0].mxu0
        %403 = vmatprep.mubr.bf16.mxu0 0
        %404 = vmatmul.mubr.bf16.gmra.mrb[0].mxu0 %v321
        %v405 = vpop.f32.mrb[0].mxu0
        %v406 = vadd.f32 0.0, %v405
        %v407 = vpop.f32.mrb[0].mxu0
        %v408 = vpop.f32.mrb[0].mxu0
        %v409 = vadd.f32 0.0, %v408
        %v410 = vpop.f32.mrb[0].mxu0
        %411 = vdwg.mxu0
        %420 = vrot.lane.b32.xlu0 %v382, 96
        %v421 = vpop.permute.xlu0 %420
        %422 = vrot.lane.b32.xlu0 %v385, 96
        %v423 = vpop.permute.xlu0 %422
        %424 = vrot.lane.b32.xlu0 %v390, 96
        %v425 = vpop.permute.xlu0 %424
        %426 = vrot.lane.b32.xlu0 %v393, 96
        %v427 = vpop.permute.xlu0 %426
        %428 = vrot.lane.b32.xlu0 %v398, 96
        %v429 = vpop.permute.xlu0 %428
        %430 = vrot.lane.b32.xlu0 %v401, 96
        %v431 = vpop.permute.xlu0 %430
        %432 = vrot.lane.b32.xlu0 %v406, 96
        %v433 = vpop.permute.xlu0 %432
        %434 = vrot.lane.b32.xlu0 %v409, 96
        %v435 = vpop.permute.xlu0 %434
        %444 = vrot.lane.b32.xlu0 %v382, 64
        %v445 = vpop.permute.xlu0 %444
        %446 = vrot.lane.b32.xlu0 %v385, 64
        %v447 = vpop.permute.xlu0 %446
        %448 = vrot.lane.b32.xlu0 %v390, 64
        %v449 = vpop.permute.xlu0 %448
        %450 = vrot.lane.b32.xlu0 %v393, 64
        %v451 = vpop.permute.xlu0 %450
        %452 = vrot.lane.b32.xlu0 %v398, 64
        %v453 = vpop.permute.xlu0 %452
        %454 = vrot.lane.b32.xlu0 %v401, 64
        %v455 = vpop.permute.xlu0 %454
        %456 = vrot.lane.b32.xlu0 %v406, 64
        %v457 = vpop.permute.xlu0 %456
        %458 = vrot.lane.b32.xlu0 %v409, 64
        %v459 = vpop.permute.xlu0 %458
        %468 = vrot.lane.b32.xlu0 %v382, 32
        %v469 = vpop.permute.xlu0 %468
        %470 = vrot.lane.b32.xlu0 %v385, 32
        %v471 = vpop.permute.xlu0 %470
        %472 = vrot.lane.b32.xlu0 %v390, 32
        %v473 = vpop.permute.xlu0 %472
        %474 = vrot.lane.b32.xlu0 %v393, 32
        %v475 = vpop.permute.xlu0 %474
        %476 = vrot.lane.b32.xlu0 %v398, 32
        %v477 = vpop.permute.xlu0 %476
        %478 = vrot.lane.b32.xlu0 %v401, 32
        %v479 = vpop.permute.xlu0 %478
        %480 = vrot.lane.b32.xlu0 %v406, 32
        %v481 = vpop.permute.xlu0 %480
        %482 = vrot.lane.b32.xlu0 %v409, 32
        %v483 = vpop.permute.xlu0 %482
        %v492 = vcombine.low %v382, %v445
        %v493 = vcombine.high %v382, %v445
        %v495 = vunpack.c.l.s4 1983009808
        %v496 = vunpack.c.0.s8 %v495
        %v497 = vlaneseq
        %v498 = vshrl.u32 %v497, 7
        %v499 = vsub.s32 %v496, %v498
        %v500 = vrot.slane %v492, %v499
        %v502 = vunpack.c.l.s4 1983009808
        %v503 = vunpack.c.0.s8 %v502
        %v504 = vlaneseq
        %v505 = vshrl.u32 %v504, 7
        %v506 = vsub.s32 %v503, %v505
        %v507 = vrot.slane %v493, %v506
        %v508 = vcombine.low %v421, %v469
        %v509 = vcombine.high %v421, %v469
        %v511 = vunpack.c.l.s4 1983009808
        %v512 = vunpack.c.0.s8 %v511
        %v513 = vlaneseq
        %v514 = vshrl.u32 %v513, 7
        %v515 = vsub.s32 %v512, %v514
        %v516 = vrot.slane %v508, %v515
        %v518 = vunpack.c.l.s4 1983009808
        %v519 = vunpack.c.0.s8 %v518
        %v520 = vlaneseq
        %v521 = vshrl.u32 %v520, 7
        %v522 = vsub.s32 %v519, %v521
        %v523 = vrot.slane %v509, %v522
        %v524 = vcombine.low %v500, %v516
        %v525 = vcombine.high %v500, %v516
        %v527 = vunpack.c.l.s4 1934713408
        %v528 = vunpack.c.0.s8 %v527
        %v529 = vlaneseq
        %v530 = vshrl.u32 %v529, 7
        %v531 = vsub.s32 %v528, %v530
        %v532 = vrot.slane %v524, %v531
        %v534 = vunpack.c.l.s4 1934713408
        %v535 = vunpack.c.0.s8 %v534
        %v536 = vlaneseq
        %v537 = vshrl.u32 %v536, 7
        %v538 = vsub.s32 %v535, %v537
        %v539 = vrot.slane %v525, %v538
        %v540 = vcombine.low %v507, %v523
        %v541 = vcombine.high %v507, %v523
        %v543 = vunpack.c.l.s4 1934713408
        %v544 = vunpack.c.0.s8 %v543
        %v545 = vlaneseq
        %v546 = vshrl.u32 %v545, 7
        %v547 = vsub.s32 %v544, %v546
        %v548 = vrot.slane %v540, %v547
        %v550 = vunpack.c.l.s4 1934713408
        %v551 = vunpack.c.0.s8 %v550
        %v552 = vlaneseq
        %v553 = vshrl.u32 %v552, 7
        %v554 = vsub.s32 %v551, %v553
        %v555 = vrot.slane %v541, %v554
        %v556 = vcombine.high %v532, 0.0
        %v557 = vcombine.high %v539, 0.0
        %v558 = vcombine.high %v548, 0.0
        %v559 = vcombine.high %v555, 0.0
        %v560 = vcombine.low %v385, %v447
        %v561 = vcombine.high %v385, %v447
        %v563 = vunpack.c.l.s4 1983009808
        %v564 = vunpack.c.0.s8 %v563
        %v565 = vlaneseq
        %v566 = vshrl.u32 %v565, 7
        %v567 = vsub.s32 %v564, %v566
        %v568 = vrot.slane %v560, %v567
        %v570 = vunpack.c.l.s4 1983009808
        %v571 = vunpack.c.0.s8 %v570
        %v572 = vlaneseq
        %v573 = vshrl.u32 %v572, 7
        %v574 = vsub.s32 %v571, %v573
        %v575 = vrot.slane %v561, %v574
        %v576 = vcombine.low %v423, %v471
        %v577 = vcombine.high %v423, %v471
        %v579 = vunpack.c.l.s4 1983009808
        %v580 = vunpack.c.0.s8 %v579
        %v581 = vlaneseq
        %v582 = vshrl.u32 %v581, 7
        %v583 = vsub.s32 %v580, %v582
        %v584 = vrot.slane %v576, %v583
        %v586 = vunpack.c.l.s4 1983009808
        %v587 = vunpack.c.0.s8 %v586
        %v588 = vlaneseq
        %v589 = vshrl.u32 %v588, 7
        %v590 = vsub.s32 %v587, %v589
        %v591 = vrot.slane %v577, %v590
        %v592 = vcombine.low %v568, %v584
        %v593 = vcombine.high %v568, %v584
        %v595 = vunpack.c.l.s4 1934713408
        %v596 = vunpack.c.0.s8 %v595
        %v597 = vlaneseq
        %v598 = vshrl.u32 %v597, 7
        %v599 = vsub.s32 %v596, %v598
        %v600 = vrot.slane %v592, %v599
        %v602 = vunpack.c.l.s4 1934713408
        %v603 = vunpack.c.0.s8 %v602
        %v604 = vlaneseq
        %v605 = vshrl.u32 %v604, 7
        %v606 = vsub.s32 %v603, %v605
        %v607 = vrot.slane %v593, %v606
        %v608 = vcombine.low %v575, %v591
        %v609 = vcombine.high %v575, %v591
        %v611 = vunpack.c.l.s4 1934713408
        %v612 = vunpack.c.0.s8 %v611
        %v613 = vlaneseq
        %v614 = vshrl.u32 %v613, 7
        %v615 = vsub.s32 %v612, %v614
        %v616 = vrot.slane %v608, %v615
        %v618 = vunpack.c.l.s4 1934713408
        %v619 = vunpack.c.0.s8 %v618
        %v620 = vlaneseq
        %v621 = vshrl.u32 %v620, 7
        %v622 = vsub.s32 %v619, %v621
        %v623 = vrot.slane %v609, %v622
        %v624 = vcombine.high %v600, 0.0
        %v625 = vcombine.high %v607, 0.0
        %v626 = vcombine.high %v616, 0.0
        %v627 = vcombine.high %v623, 0.0
        %v628 = vcombine.low %v390, %v449
        %v629 = vcombine.high %v390, %v449
        %v631 = vunpack.c.l.s4 1983009808
        %v632 = vunpack.c.0.s8 %v631
        %v633 = vlaneseq
        %v634 = vshrl.u32 %v633, 7
        %v635 = vsub.s32 %v632, %v634
        %v636 = vrot.slane %v628, %v635
        %v638 = vunpack.c.l.s4 1983009808
        %v639 = vunpack.c.0.s8 %v638
        %v640 = vlaneseq
        %v641 = vshrl.u32 %v640, 7
        %v642 = vsub.s32 %v639, %v641
        %v643 = vrot.slane %v629, %v642
        %v644 = vcombine.low %v425, %v473
        %v645 = vcombine.high %v425, %v473
        %v647 = vunpack.c.l.s4 1983009808
        %v648 = vunpack.c.0.s8 %v647
        %v649 = vlaneseq
        %v650 = vshrl.u32 %v649, 7
        %v651 = vsub.s32 %v648, %v650
        %v652 = vrot.slane %v644, %v651
        %v654 = vunpack.c.l.s4 1983009808
        %v655 = vunpack.c.0.s8 %v654
        %v656 = vlaneseq
        %v657 = vshrl.u32 %v656, 7
        %v658 = vsub.s32 %v655, %v657
        %v659 = vrot.slane %v645, %v658
        %v660 = vcombine.low %v636, %v652
        %v661 = vcombine.high %v636, %v652
        %v663 = vunpack.c.l.s4 1934713408
        %v664 = vunpack.c.0.s8 %v663
        %v665 = vlaneseq
        %v666 = vshrl.u32 %v665, 7
        %v667 = vsub.s32 %v664, %v666
        %v668 = vrot.slane %v660, %v667
        %v670 = vunpack.c.l.s4 1934713408
        %v671 = vunpack.c.0.s8 %v670
        %v672 = vlaneseq
        %v673 = vshrl.u32 %v672, 7
        %v674 = vsub.s32 %v671, %v673
        %v675 = vrot.slane %v661, %v674
        %v676 = vcombine.low %v643, %v659
        %v677 = vcombine.high %v643, %v659
        %v679 = vunpack.c.l.s4 1934713408
        %v680 = vunpack.c.0.s8 %v679
        %v681 = vlaneseq
        %v682 = vshrl.u32 %v681, 7
        %v683 = vsub.s32 %v680, %v682
        %v684 = vrot.slane %v676, %v683
        %v686 = vunpack.c.l.s4 1934713408
        %v687 = vunpack.c.0.s8 %v686
        %v688 = vlaneseq
        %v689 = vshrl.u32 %v688, 7
        %v690 = vsub.s32 %v687, %v689
        %v691 = vrot.slane %v677, %v690
        %v692 = vcombine.high %v668, 0.0
        %v693 = vcombine.high %v675, 0.0
        %v694 = vcombine.high %v684, 0.0
        %v695 = vcombine.high %v691, 0.0
        %v696 = vcombine.low %v393, %v451
        %v697 = vcombine.high %v393, %v451
        %v699 = vunpack.c.l.s4 1983009808
        %v700 = vunpack.c.0.s8 %v699
        %v701 = vlaneseq
        %v702 = vshrl.u32 %v701, 7
        %v703 = vsub.s32 %v700, %v702
        %v704 = vrot.slane %v696, %v703
        %v706 = vunpack.c.l.s4 1983009808
        %v707 = vunpack.c.0.s8 %v706
        %v708 = vlaneseq
        %v709 = vshrl.u32 %v708, 7
        %v710 = vsub.s32 %v707, %v709
        %v711 = vrot.slane %v697, %v710
        %v712 = vcombine.low %v427, %v475
        %v713 = vcombine.high %v427, %v475
        %v715 = vunpack.c.l.s4 1983009808
        %v716 = vunpack.c.0.s8 %v715
        %v717 = vlaneseq
        %v718 = vshrl.u32 %v717, 7
        %v719 = vsub.s32 %v716, %v718
        %v720 = vrot.slane %v712, %v719
        %v722 = vunpack.c.l.s4 1983009808
        %v723 = vunpack.c.0.s8 %v722
        %v724 = vlaneseq
        %v725 = vshrl.u32 %v724, 7
        %v726 = vsub.s32 %v723, %v725
        %v727 = vrot.slane %v713, %v726
        %v728 = vcombine.low %v704, %v720
        %v729 = vcombine.high %v704, %v720
        %v731 = vunpack.c.l.s4 1934713408
        %v732 = vunpack.c.0.s8 %v731
        %v733 = vlaneseq
        %v734 = vshrl.u32 %v733, 7
        %v735 = vsub.s32 %v732, %v734
        %v736 = vrot.slane %v728, %v735
        %v738 = vunpack.c.l.s4 1934713408
        %v739 = vunpack.c.0.s8 %v738
        %v740 = vlaneseq
        %v741 = vshrl.u32 %v740, 7
        %v742 = vsub.s32 %v739, %v741
        %v743 = vrot.slane %v729, %v742
        %v744 = vcombine.low %v711, %v727
        %v745 = vcombine.high %v711, %v727
        %v747 = vunpack.c.l.s4 1934713408
        %v748 = vunpack.c.0.s8 %v747
        %v749 = vlaneseq
        %v750 = vshrl.u32 %v749, 7
        %v751 = vsub.s32 %v748, %v750
        %v752 = vrot.slane %v744, %v751
        %v754 = vunpack.c.l.s4 1934713408
        %v755 = vunpack.c.0.s8 %v754
        %v756 = vlaneseq
        %v757 = vshrl.u32 %v756, 7
        %v758 = vsub.s32 %v755, %v757
        %v759 = vrot.slane %v745, %v758
        %v760 = vcombine.high %v736, 0.0
        %v761 = vcombine.high %v743, 0.0
        %v762 = vcombine.high %v752, 0.0
        %v763 = vcombine.high %v759, 0.0
        %v764 = vcombine.low %v398, %v453
        %v765 = vcombine.high %v398, %v453
        %v767 = vunpack.c.l.s4 1983009808
        %v768 = vunpack.c.0.s8 %v767
        %v769 = vlaneseq
        %v770 = vshrl.u32 %v769, 7
        %v771 = vsub.s32 %v768, %v770
        %v772 = vrot.slane %v764, %v771
        %v774 = vunpack.c.l.s4 1983009808
        %v775 = vunpack.c.0.s8 %v774
        %v776 = vlaneseq
        %v777 = vshrl.u32 %v776, 7
        %v778 = vsub.s32 %v775, %v777
        %v779 = vrot.slane %v765, %v778
        %v780 = vcombine.low %v429, %v477
        %v781 = vcombine.high %v429, %v477
        %v783 = vunpack.c.l.s4 1983009808
        %v784 = vunpack.c.0.s8 %v783
        %v785 = vlaneseq
        %v786 = vshrl.u32 %v785, 7
        %v787 = vsub.s32 %v784, %v786
        %v788 = vrot.slane %v780, %v787
        %v790 = vunpack.c.l.s4 1983009808
        %v791 = vunpack.c.0.s8 %v790
        %v792 = vlaneseq
        %v793 = vshrl.u32 %v792, 7
        %v794 = vsub.s32 %v791, %v793
        %v795 = vrot.slane %v781, %v794
        %v796 = vcombine.low %v772, %v788
        %v797 = vcombine.high %v772, %v788
        %v799 = vunpack.c.l.s4 1934713408
        %v800 = vunpack.c.0.s8 %v799
        %v801 = vlaneseq
        %v802 = vshrl.u32 %v801, 7
        %v803 = vsub.s32 %v800, %v802
        %v804 = vrot.slane %v796, %v803
        %v806 = vunpack.c.l.s4 1934713408
        %v807 = vunpack.c.0.s8 %v806
        %v808 = vlaneseq
        %v809 = vshrl.u32 %v808, 7
        %v810 = vsub.s32 %v807, %v809
        %v811 = vrot.slane %v797, %v810
        %v812 = vcombine.low %v779, %v795
        %v813 = vcombine.high %v779, %v795
        %v815 = vunpack.c.l.s4 1934713408
        %v816 = vunpack.c.0.s8 %v815
        %v817 = vlaneseq
        %v818 = vshrl.u32 %v817, 7
        %v819 = vsub.s32 %v816, %v818
        %v820 = vrot.slane %v812, %v819
        %v822 = vunpack.c.l.s4 1934713408
        %v823 = vunpack.c.0.s8 %v822
        %v824 = vlaneseq
        %v825 = vshrl.u32 %v824, 7
        %v826 = vsub.s32 %v823, %v825
        %v827 = vrot.slane %v813, %v826
        %v828 = vcombine.high %v804, 0.0
        %v829 = vcombine.high %v811, 0.0
        %v830 = vcombine.high %v820, 0.0
        %v831 = vcombine.high %v827, 0.0
        %v832 = vcombine.low %v401, %v455
        %v833 = vcombine.high %v401, %v455
        %v835 = vunpack.c.l.s4 1983009808
        %v836 = vunpack.c.0.s8 %v835
        %v837 = vlaneseq
        %v838 = vshrl.u32 %v837, 7
        %v839 = vsub.s32 %v836, %v838
        %v840 = vrot.slane %v832, %v839
        %v842 = vunpack.c.l.s4 1983009808
        %v843 = vunpack.c.0.s8 %v842
        %v844 = vlaneseq
        %v845 = vshrl.u32 %v844, 7
        %v846 = vsub.s32 %v843, %v845
        %v847 = vrot.slane %v833, %v846
        %v848 = vcombine.low %v431, %v479
        %v849 = vcombine.high %v431, %v479
        %v851 = vunpack.c.l.s4 1983009808
        %v852 = vunpack.c.0.s8 %v851
        %v853 = vlaneseq
        %v854 = vshrl.u32 %v853, 7
        %v855 = vsub.s32 %v852, %v854
        %v856 = vrot.slane %v848, %v855
        %v858 = vunpack.c.l.s4 1983009808
        %v859 = vunpack.c.0.s8 %v858
        %v860 = vlaneseq
        %v861 = vshrl.u32 %v860, 7
        %v862 = vsub.s32 %v859, %v861
        %v863 = vrot.slane %v849, %v862
        %v864 = vcombine.low %v840, %v856
        %v865 = vcombine.high %v840, %v856
        %v867 = vunpack.c.l.s4 1934713408
        %v868 = vunpack.c.0.s8 %v867
        %v869 = vlaneseq
        %v870 = vshrl.u32 %v869, 7
        %v871 = vsub.s32 %v868, %v870
        %v872 = vrot.slane %v864, %v871
        %v874 = vunpack.c.l.s4 1934713408
        %v875 = vunpack.c.0.s8 %v874
        %v876 = vlaneseq
        %v877 = vshrl.u32 %v876, 7
        %v878 = vsub.s32 %v875, %v877
        %v879 = vrot.slane %v865, %v878
        %v880 = vcombine.low %v847, %v863
        %v881 = vcombine.high %v847, %v863
        %v883 = vunpack.c.l.s4 1934713408
        %v884 = vunpack.c.0.s8 %v883
        %v885 = vlaneseq
        %v886 = vshrl.u32 %v885, 7
        %v887 = vsub.s32 %v884, %v886
        %v888 = vrot.slane %v880, %v887
        %v890 = vunpack.c.l.s4 1934713408
        %v891 = vunpack.c.0.s8 %v890
        %v892 = vlaneseq
        %v893 = vshrl.u32 %v892, 7
        %v894 = vsub.s32 %v891, %v893
        %v895 = vrot.slane %v881, %v894
        %v896 = vcombine.high %v872, 0.0
        %v897 = vcombine.high %v879, 0.0
        %v898 = vcombine.high %v888, 0.0
        %v899 = vcombine.high %v895, 0.0
        %v900 = vcombine.low %v406, %v457
        %v901 = vcombine.high %v406, %v457
        %v903 = vunpack.c.l.s4 1983009808
        %v904 = vunpack.c.0.s8 %v903
        %v905 = vlaneseq
        %v906 = vshrl.u32 %v905, 7
        %v907 = vsub.s32 %v904, %v906
        %v908 = vrot.slane %v900, %v907
        %v910 = vunpack.c.l.s4 1983009808
        %v911 = vunpack.c.0.s8 %v910
        %v912 = vlaneseq
        %v913 = vshrl.u32 %v912, 7
        %v914 = vsub.s32 %v911, %v913
        %v915 = vrot.slane %v901, %v914
        %v916 = vcombine.low %v433, %v481
        %v917 = vcombine.high %v433, %v481
        %v919 = vunpack.c.l.s4 1983009808
        %v920 = vunpack.c.0.s8 %v919
        %v921 = vlaneseq
        %v922 = vshrl.u32 %v921, 7
        %v923 = vsub.s32 %v920, %v922
        %v924 = vrot.slane %v916, %v923
        %v926 = vunpack.c.l.s4 1983009808
        %v927 = vunpack.c.0.s8 %v926
        %v928 = vlaneseq
        %v929 = vshrl.u32 %v928, 7
        %v930 = vsub.s32 %v927, %v929
        %v931 = vrot.slane %v917, %v930
        %v932 = vcombine.low %v908, %v924
        %v933 = vcombine.high %v908, %v924
        %v935 = vunpack.c.l.s4 1934713408
        %v936 = vunpack.c.0.s8 %v935
        %v937 = vlaneseq
        %v938 = vshrl.u32 %v937, 7
        %v939 = vsub.s32 %v936, %v938
        %v940 = vrot.slane %v932, %v939
        %v942 = vunpack.c.l.s4 1934713408
        %v943 = vunpack.c.0.s8 %v942
        %v944 = vlaneseq
        %v945 = vshrl.u32 %v944, 7
        %v946 = vsub.s32 %v943, %v945
        %v947 = vrot.slane %v933, %v946
        %v948 = vcombine.low %v915, %v931
        %v949 = vcombine.high %v915, %v931
        %v951 = vunpack.c.l.s4 1934713408
        %v952 = vunpack.c.0.s8 %v951
        %v953 = vlaneseq
        %v954 = vshrl.u32 %v953, 7
        %v955 = vsub.s32 %v952, %v954
        %v956 = vrot.slane %v948, %v955
        %v958 = vunpack.c.l.s4 1934713408
        %v959 = vunpack.c.0.s8 %v958
        %v960 = vlaneseq
        %v961 = vshrl.u32 %v960, 7
        %v962 = vsub.s32 %v959, %v961
        %v963 = vrot.slane %v949, %v962
        %v964 = vcombine.high %v940, 0.0
        %v965 = vcombine.high %v947, 0.0
        %v966 = vcombine.high %v956, 0.0
        %v967 = vcombine.high %v963, 0.0
        %v968 = vcombine.low %v409, %v459
        %v969 = vcombine.high %v409, %v459
        %v971 = vunpack.c.l.s4 1983009808
        %v972 = vunpack.c.0.s8 %v971
        %v973 = vlaneseq
        %v974 = vshrl.u32 %v973, 7
        %v975 = vsub.s32 %v972, %v974
        %v976 = vrot.slane %v968, %v975
        %v978 = vunpack.c.l.s4 1983009808
        %v979 = vunpack.c.0.s8 %v978
        %v980 = vlaneseq
        %v981 = vshrl.u32 %v980, 7
        %v982 = vsub.s32 %v979, %v981
        %v983 = vrot.slane %v969, %v982
        %v984 = vcombine.low %v435, %v483
        %v985 = vcombine.high %v435, %v483
        %v987 = vunpack.c.l.s4 1983009808
        %v988 = vunpack.c.0.s8 %v987
        %v989 = vlaneseq
        %v990 = vshrl.u32 %v989, 7
        %v991 = vsub.s32 %v988, %v990
        %v992 = vrot.slane %v984, %v991
        %v994 = vunpack.c.l.s4 1983009808
        %v995 = vunpack.c.0.s8 %v994
        %v996 = vlaneseq
        %v997 = vshrl.u32 %v996, 7
        %v998 = vsub.s32 %v995, %v997
        %v999 = vrot.slane %v985, %v998
        %v1000 = vcombine.low %v976, %v992
        %v1001 = vcombine.high %v976, %v992
        %v1003 = vunpack.c.l.s4 1934713408
        %v1004 = vunpack.c.0.s8 %v1003
        %v1005 = vlaneseq
        %v1006 = vshrl.u32 %v1005, 7
        %v1007 = vsub.s32 %v1004, %v1006
        %v1008 = vrot.slane %v1000, %v1007
        %v1010 = vunpack.c.l.s4 1934713408
        %v1011 = vunpack.c.0.s8 %v1010
        %v1012 = vlaneseq
        %v1013 = vshrl.u32 %v1012, 7
        %v1014 = vsub.s32 %v1011, %v1013
        %v1015 = vrot.slane %v1001, %v1014
        %v1016 = vcombine.low %v983, %v999
        %v1017 = vcombine.high %v983, %v999
        %v1019 = vunpack.c.l.s4 1934713408
        %v1020 = vunpack.c.0.s8 %v1019
        %v1021 = vlaneseq
        %v1022 = vshrl.u32 %v1021, 7
        %v1023 = vsub.s32 %v1020, %v1022
        %v1024 = vrot.slane %v1016, %v1023
        %v1026 = vunpack.c.l.s4 1934713408
        %v1027 = vunpack.c.0.s8 %v1026
        %v1028 = vlaneseq
        %v1029 = vshrl.u32 %v1028, 7
        %v1030 = vsub.s32 %v1027, %v1029
        %v1031 = vrot.slane %v1017, %v1030
        %v1032 = vcombine.high %v1008, 0.0
        %v1033 = vcombine.high %v1015, 0.0
        %v1034 = vcombine.high %v1024, 0.0
        %v1035 = vcombine.high %v1031, 0.0
        %vm1036 = vcmask 257024
        %v1037 = vsel %vm1036, %v532, 0.0
        %1038 = vadd.xlane.f32.xlu0 %v1037
        %v1039 = vpop.xlane.xlu0 %1038
        %v1040 = vsel %vm1036, %v556, 0.0
        %1041 = vadd.xlane.f32.xlu0 %v1040
        %v1042 = vpop.xlane.xlu0 %1041
        %v1043 = vsel %vm1036, %v539, 0.0
        %1044 = vadd.xlane.f32.xlu0 %v1043
        %v1045 = vpop.xlane.xlu0 %1044
        %v1046 = vsel %vm1036, %v557, 0.0
        %1047 = vadd.xlane.f32.xlu0 %v1046
        %v1048 = vpop.xlane.xlu0 %1047
        %v1049 = vsel %vm1036, %v548, 0.0
        %1050 = vadd.xlane.f32.xlu0 %v1049
        %v1051 = vpop.xlane.xlu0 %1050
        %v1052 = vsel %vm1036, %v558, 0.0
        %1053 = vadd.xlane.f32.xlu0 %v1052
        %v1054 = vpop.xlane.xlu0 %1053
        %v1055 = vsel %vm1036, %v555, 0.0
        %1056 = vadd.xlane.f32.xlu0 %v1055
        %v1057 = vpop.xlane.xlu0 %1056
        %v1058 = vsel %vm1036, %v559, 0.0
        %1059 = vadd.xlane.f32.xlu0 %v1058
        %v1060 = vpop.xlane.xlu0 %1059
        %v1061 = vsel %vm1036, %v600, 0.0
        %1062 = vadd.xlane.f32.xlu0 %v1061
        %v1063 = vpop.xlane.xlu0 %1062
        %v1064 = vsel %vm1036, %v624, 0.0
        %1065 = vadd.xlane.f32.xlu0 %v1064
        %v1066 = vpop.xlane.xlu0 %1065
        %v1067 = vsel %vm1036, %v607, 0.0
        %1068 = vadd.xlane.f32.xlu0 %v1067
        %v1069 = vpop.xlane.xlu0 %1068
        %v1070 = vsel %vm1036, %v625, 0.0
        %1071 = vadd.xlane.f32.xlu0 %v1070
        %v1072 = vpop.xlane.xlu0 %1071
        %v1073 = vsel %vm1036, %v616, 0.0
        %1074 = vadd.xlane.f32.xlu0 %v1073
        %v1075 = vpop.xlane.xlu0 %1074
        %v1076 = vsel %vm1036, %v626, 0.0
        %1077 = vadd.xlane.f32.xlu0 %v1076
        %v1078 = vpop.xlane.xlu0 %1077
        %v1079 = vsel %vm1036, %v623, 0.0
        %1080 = vadd.xlane.f32.xlu0 %v1079
        %v1081 = vpop.xlane.xlu0 %1080
        %v1082 = vsel %vm1036, %v627, 0.0
        %1083 = vadd.xlane.f32.xlu0 %v1082
        %v1084 = vpop.xlane.xlu0 %1083
        %v1085 = vsel %vm1036, %v668, 0.0
        %1086 = vadd.xlane.f32.xlu0 %v1085
        %v1087 = vpop.xlane.xlu0 %1086
        %v1088 = vsel %vm1036, %v692, 0.0
        %1089 = vadd.xlane.f32.xlu0 %v1088
        %v1090 = vpop.xlane.xlu0 %1089
        %v1091 = vsel %vm1036, %v675, 0.0
        %1092 = vadd.xlane.f32.xlu0 %v1091
        %v1093 = vpop.xlane.xlu0 %1092
        %v1094 = vsel %vm1036, %v693, 0.0
        %1095 = vadd.xlane.f32.xlu0 %v1094
        %v1096 = vpop.xlane.xlu0 %1095
        %v1097 = vsel %vm1036, %v684, 0.0
        %1098 = vadd.xlane.f32.xlu0 %v1097
        %v1099 = vpop.xlane.xlu0 %1098
        %v1100 = vsel %vm1036, %v694, 0.0
        %1101 = vadd.xlane.f32.xlu0 %v1100
        %v1102 = vpop.xlane.xlu0 %1101
        %v1103 = vsel %vm1036, %v691, 0.0
        %1104 = vadd.xlane.f32.xlu0 %v1103
        %v1105 = vpop.xlane.xlu0 %1104
        %v1106 = vsel %vm1036, %v695, 0.0
        %1107 = vadd.xlane.f32.xlu0 %v1106
        %v1108 = vpop.xlane.xlu0 %1107
        %v1109 = vsel %vm1036, %v736, 0.0
        %1110 = vadd.xlane.f32.xlu0 %v1109
        %v1111 = vpop.xlane.xlu0 %1110
        %v1112 = vsel %vm1036, %v760, 0.0
        %1113 = vadd.xlane.f32.xlu0 %v1112
        %v1114 = vpop.xlane.xlu0 %1113
        %v1115 = vsel %vm1036, %v743, 0.0
        %1116 = vadd.xlane.f32.xlu0 %v1115
        %v1117 = vpop.xlane.xlu0 %1116
        %v1118 = vsel %vm1036, %v761, 0.0
        %1119 = vadd.xlane.f32.xlu0 %v1118
        %v1120 = vpop.xlane.xlu0 %1119
        %v1121 = vsel %vm1036, %v752, 0.0
        %1122 = vadd.xlane.f32.xlu0 %v1121
        %v1123 = vpop.xlane.xlu0 %1122
        %v1124 = vsel %vm1036, %v762, 0.0
        %1125 = vadd.xlane.f32.xlu0 %v1124
        %v1126 = vpop.xlane.xlu0 %1125
        %v1127 = vsel %vm1036, %v759, 0.0
        %1128 = vadd.xlane.f32.xlu0 %v1127
        %v1129 = vpop.xlane.xlu0 %1128
        %v1130 = vsel %vm1036, %v763, 0.0
        %1131 = vadd.xlane.f32.xlu0 %v1130
        %v1132 = vpop.xlane.xlu0 %1131
        %v1133 = vsel %vm1036, %v804, 0.0
        %1134 = vadd.xlane.f32.xlu0 %v1133
        %v1135 = vpop.xlane.xlu0 %1134
        %v1136 = vsel %vm1036, %v828, 0.0
        %1137 = vadd.xlane.f32.xlu0 %v1136
        %v1138 = vpop.xlane.xlu0 %1137
        %v1139 = vsel %vm1036, %v811, 0.0
        %1140 = vadd.xlane.f32.xlu0 %v1139
        %v1141 = vpop.xlane.xlu0 %1140
        %v1142 = vsel %vm1036, %v829, 0.0
        %1143 = vadd.xlane.f32.xlu0 %v1142
        %v1144 = vpop.xlane.xlu0 %1143
        %v1145 = vsel %vm1036, %v820, 0.0
        %1146 = vadd.xlane.f32.xlu0 %v1145
        %v1147 = vpop.xlane.xlu0 %1146
        %v1148 = vsel %vm1036, %v830, 0.0
        %1149 = vadd.xlane.f32.xlu0 %v1148
        %v1150 = vpop.xlane.xlu0 %1149
        %v1151 = vsel %vm1036, %v827, 0.0
        %1152 = vadd.xlane.f32.xlu0 %v1151
        %v1153 = vpop.xlane.xlu0 %1152
        %v1154 = vsel %vm1036, %v831, 0.0
        %1155 = vadd.xlane.f32.xlu0 %v1154
        %v1156 = vpop.xlane.xlu0 %1155
        %v1157 = vsel %vm1036, %v872, 0.0
        %1158 = vadd.xlane.f32.xlu0 %v1157
        %v1159 = vpop.xlane.xlu0 %1158
        %v1160 = vsel %vm1036, %v896, 0.0
        %1161 = vadd.xlane.f32.xlu0 %v1160
        %v1162 = vpop.xlane.xlu0 %1161
        %v1163 = vsel %vm1036, %v879, 0.0
        %1164 = vadd.xlane.f32.xlu0 %v1163
        %v1165 = vpop.xlane.xlu0 %1164
        %v1166 = vsel %vm1036, %v897, 0.0
        %1167 = vadd.xlane.f32.xlu0 %v1166
        %v1168 = vpop.xlane.xlu0 %1167
        %v1169 = vsel %vm1036, %v888, 0.0
        %1170 = vadd.xlane.f32.xlu0 %v1169
        %v1171 = vpop.xlane.xlu0 %1170
        %v1172 = vsel %vm1036, %v898, 0.0
        %1173 = vadd.xlane.f32.xlu0 %v1172
        %v1174 = vpop.xlane.xlu0 %1173
        %v1175 = vsel %vm1036, %v895, 0.0
        %1176 = vadd.xlane.f32.xlu0 %v1175
        %v1177 = vpop.xlane.xlu0 %1176
        %v1178 = vsel %vm1036, %v899, 0.0
        %1179 = vadd.xlane.f32.xlu0 %v1178
        %v1180 = vpop.xlane.xlu0 %1179
        %v1181 = vsel %vm1036, %v940, 0.0
        %1182 = vadd.xlane.f32.xlu0 %v1181
        %v1183 = vpop.xlane.xlu0 %1182
        %v1184 = vsel %vm1036, %v964, 0.0
        %1185 = vadd.xlane.f32.xlu0 %v1184
        %v1186 = vpop.xlane.xlu0 %1185
        %v1187 = vsel %vm1036, %v947, 0.0
        %1188 = vadd.xlane.f32.xlu0 %v1187
        %v1189 = vpop.xlane.xlu0 %1188
        %v1190 = vsel %vm1036, %v965, 0.0
        %1191 = vadd.xlane.f32.xlu0 %v1190
        %v1192 = vpop.xlane.xlu0 %1191
        %v1193 = vsel %vm1036, %v956, 0.0
        %1194 = vadd.xlane.f32.xlu0 %v1193
        %v1195 = vpop.xlane.xlu0 %1194
        %v1196 = vsel %vm1036, %v966, 0.0
        %1197 = vadd.xlane.f32.xlu0 %v1196
        %v1198 = vpop.xlane.xlu0 %1197
        %v1199 = vsel %vm1036, %v963, 0.0
        %1200 = vadd.xlane.f32.xlu0 %v1199
        %v1201 = vpop.xlane.xlu0 %1200
        %v1202 = vsel %vm1036, %v967, 0.0
        %1203 = vadd.xlane.f32.xlu0 %v1202
        %v1204 = vpop.xlane.xlu0 %1203
        %v1205 = vsel %vm1036, %v1008, 0.0
        %1206 = vadd.xlane.f32.xlu0 %v1205
        %v1207 = vpop.xlane.xlu0 %1206
        %v1208 = vsel %vm1036, %v1032, 0.0
        %1209 = vadd.xlane.f32.xlu0 %v1208
        %v1210 = vpop.xlane.xlu0 %1209
        %v1211 = vsel %vm1036, %v1015, 0.0
        %1212 = vadd.xlane.f32.xlu0 %v1211
        %v1213 = vpop.xlane.xlu0 %1212
        %v1214 = vsel %vm1036, %v1033, 0.0
        %1215 = vadd.xlane.f32.xlu0 %v1214
        %v1216 = vpop.xlane.xlu0 %1215
        %v1217 = vsel %vm1036, %v1024, 0.0
        %1218 = vadd.xlane.f32.xlu0 %v1217
        %v1219 = vpop.xlane.xlu0 %1218
        %v1220 = vsel %vm1036, %v1034, 0.0
        %1221 = vadd.xlane.f32.xlu0 %v1220
        %v1222 = vpop.xlane.xlu0 %1221
        %v1223 = vsel %vm1036, %v1031, 0.0
        %1224 = vadd.xlane.f32.xlu0 %v1223
        %v1225 = vpop.xlane.xlu0 %1224
        %v1226 = vsel %vm1036, %v1035, 0.0
        %1227 = vadd.xlane.f32.xlu0 %v1226
        %v1228 = vpop.xlane.xlu0 %1227
        %v1229 = vrcp.pop 32.0
        %v1230 = vmul.f32 %v1039, %v1229
        %v1231 = vmul.f32 %v1042, %v1229
        %v1232 = vmul.f32 %v1045, %v1229
        %v1233 = vmul.f32 %v1048, %v1229
        %v1234 = vmul.f32 %v1051, %v1229
        %v1235 = vmul.f32 %v1054, %v1229
        %v1236 = vmul.f32 %v1057, %v1229
        %v1237 = vmul.f32 %v1060, %v1229
        %v1238 = vmul.f32 %v1063, %v1229
        %v1239 = vmul.f32 %v1066, %v1229
        %v1240 = vmul.f32 %v1069, %v1229
        %v1241 = vmul.f32 %v1072, %v1229
        %v1242 = vmul.f32 %v1075, %v1229
        %v1243 = vmul.f32 %v1078, %v1229
        %v1244 = vmul.f32 %v1081, %v1229
        %v1245 = vmul.f32 %v1084, %v1229
        %v1246 = vmul.f32 %v1087, %v1229
        %v1247 = vmul.f32 %v1090, %v1229
        %v1248 = vmul.f32 %v1093, %v1229
        %v1249 = vmul.f32 %v1096, %v1229
        %v1250 = vmul.f32 %v1099, %v1229
        %v1251 = vmul.f32 %v1102, %v1229
        %v1252 = vmul.f32 %v1105, %v1229
        %v1253 = vmul.f32 %v1108, %v1229
        %v1254 = vmul.f32 %v1111, %v1229
        %v1255 = vmul.f32 %v1114, %v1229
        %v1256 = vmul.f32 %v1117, %v1229
        %v1257 = vmul.f32 %v1120, %v1229
        %v1258 = vmul.f32 %v1123, %v1229
        %v1259 = vmul.f32 %v1126, %v1229
        %v1260 = vmul.f32 %v1129, %v1229
        %v1261 = vmul.f32 %v1132, %v1229
        %v1262 = vmul.f32 %v1135, %v1229
        %v1263 = vmul.f32 %v1138, %v1229
        %v1264 = vmul.f32 %v1141, %v1229
        %v1265 = vmul.f32 %v1144, %v1229
        %v1266 = vmul.f32 %v1147, %v1229
        %v1267 = vmul.f32 %v1150, %v1229
        %v1268 = vmul.f32 %v1153, %v1229
        %v1269 = vmul.f32 %v1156, %v1229
        %v1270 = vmul.f32 %v1159, %v1229
        %v1271 = vmul.f32 %v1162, %v1229
        %v1272 = vmul.f32 %v1165, %v1229
        %v1273 = vmul.f32 %v1168, %v1229
        %v1274 = vmul.f32 %v1171, %v1229
        %v1275 = vmul.f32 %v1174, %v1229
        %v1276 = vmul.f32 %v1177, %v1229
        %v1277 = vmul.f32 %v1180, %v1229
        %v1278 = vmul.f32 %v1183, %v1229
        %v1279 = vmul.f32 %v1186, %v1229
        %v1280 = vmul.f32 %v1189, %v1229
        %v1281 = vmul.f32 %v1192, %v1229
        %v1282 = vmul.f32 %v1195, %v1229
        %v1283 = vmul.f32 %v1198, %v1229
        %v1284 = vmul.f32 %v1201, %v1229
        %v1285 = vmul.f32 %v1204, %v1229
        %v1286 = vmul.f32 %v1207, %v1229
        %v1287 = vmul.f32 %v1210, %v1229
        %v1288 = vmul.f32 %v1213, %v1229
        %v1289 = vmul.f32 %v1216, %v1229
        %v1290 = vmul.f32 %v1219, %v1229
        %v1291 = vmul.f32 %v1222, %v1229
        %v1292 = vmul.f32 %v1225, %v1229
        %v1293 = vmul.f32 %v1228, %v1229
        %v1294 = vsub.f32 %v532, %v1230
        %v1295 = vsub.f32 %v556, %v1231
        %v1296 = vsub.f32 %v539, %v1232
        %v1297 = vsub.f32 %v557, %v1233
        %v1298 = vsub.f32 %v548, %v1234
        %v1299 = vsub.f32 %v558, %v1235
        %v1300 = vsub.f32 %v555, %v1236
        %v1301 = vsub.f32 %v559, %v1237
        %v1302 = vsub.f32 %v600, %v1238
        %v1303 = vsub.f32 %v624, %v1239
        %v1304 = vsub.f32 %v607, %v1240
        %v1305 = vsub.f32 %v625, %v1241
        %v1306 = vsub.f32 %v616, %v1242
        %v1307 = vsub.f32 %v626, %v1243
        %v1308 = vsub.f32 %v623, %v1244
        %v1309 = vsub.f32 %v627, %v1245
        %v1310 = vsub.f32 %v668, %v1246
        %v1311 = vsub.f32 %v692, %v1247
        %v1312 = vsub.f32 %v675, %v1248
        %v1313 = vsub.f32 %v693, %v1249
        %v1314 = vsub.f32 %v684, %v1250
        %v1315 = vsub.f32 %v694, %v1251
        %v1316 = vsub.f32 %v691, %v1252
        %v1317 = vsub.f32 %v695, %v1253
        %v1318 = vsub.f32 %v736, %v1254
        %v1319 = vsub.f32 %v760, %v1255
        %v1320 = vsub.f32 %v743, %v1256
        %v1321 = vsub.f32 %v761, %v1257
        %v1322 = vsub.f32 %v752, %v1258
        %v1323 = vsub.f32 %v762, %v1259
        %v1324 = vsub.f32 %v759, %v1260
        %v1325 = vsub.f32 %v763, %v1261
        %v1326 = vsub.f32 %v804, %v1262
        %v1327 = vsub.f32 %v828, %v1263
        %v1328 = vsub.f32 %v811, %v1264
        %v1329 = vsub.f32 %v829, %v1265
        %v1330 = vsub.f32 %v820, %v1266
        %v1331 = vsub.f32 %v830, %v1267
        %v1332 = vsub.f32 %v827, %v1268
        %v1333 = vsub.f32 %v831, %v1269
        %v1334 = vsub.f32 %v872, %v1270
        %v1335 = vsub.f32 %v896, %v1271
        %v1336 = vsub.f32 %v879, %v1272
        %v1337 = vsub.f32 %v897, %v1273
        %v1338 = vsub.f32 %v888, %v1274
        %v1339 = vsub.f32 %v898, %v1275
        %v1340 = vsub.f32 %v895, %v1276
        %v1341 = vsub.f32 %v899, %v1277
        %v1342 = vsub.f32 %v940, %v1278
        %v1343 = vsub.f32 %v964, %v1279
        %v1344 = vsub.f32 %v947, %v1280
        %v1345 = vsub.f32 %v965, %v1281
        %v1346 = vsub.f32 %v956, %v1282
        %v1347 = vsub.f32 %v966, %v1283
        %v1348 = vsub.f32 %v963, %v1284
        %v1349 = vsub.f32 %v967, %v1285
        %v1350 = vsub.f32 %v1008, %v1286
        %v1351 = vsub.f32 %v1032, %v1287
        %v1352 = vsub.f32 %v1015, %v1288
        %v1353 = vsub.f32 %v1033, %v1289
        %v1354 = vsub.f32 %v1024, %v1290
        %v1355 = vsub.f32 %v1034, %v1291
        %v1356 = vsub.f32 %v1031, %v1292
        %v1357 = vsub.f32 %v1035, %v1293
        %v1358 = vmul.f32 %v1294, %v1294
        %v1359 = vmul.f32 %v1295, %v1295
        %v1360 = vmul.f32 %v1296, %v1296
        %v1361 = vmul.f32 %v1297, %v1297
        %v1362 = vmul.f32 %v1298, %v1298
        %v1363 = vmul.f32 %v1299, %v1299
        %v1364 = vmul.f32 %v1300, %v1300
        %v1365 = vmul.f32 %v1301, %v1301
        %v1366 = vmul.f32 %v1302, %v1302
        %v1367 = vmul.f32 %v1303, %v1303
        %v1368 = vmul.f32 %v1304, %v1304
        %v1369 = vmul.f32 %v1305, %v1305
        %v1370 = vmul.f32 %v1306, %v1306
        %v1371 = vmul.f32 %v1307, %v1307
        %v1372 = vmul.f32 %v1308, %v1308
        %v1373 = vmul.f32 %v1309, %v1309
        %v1374 = vmul.f32 %v1310, %v1310
        %v1375 = vmul.f32 %v1311, %v1311
        %v1376 = vmul.f32 %v1312, %v1312
        %v1377 = vmul.f32 %v1313, %v1313
        %v1378 = vmul.f32 %v1314, %v1314
        %v1379 = vmul.f32 %v1315, %v1315
        %v1380 = vmul.f32 %v1316, %v1316
        %v1381 = vmul.f32 %v1317, %v1317
        %v1382 = vmul.f32 %v1318, %v1318
        %v1383 = vmul.f32 %v1319, %v1319
        %v1384 = vmul.f32 %v1320, %v1320
        %v1385 = vmul.f32 %v1321, %v1321
        %v1386 = vmul.f32 %v1322, %v1322
        %v1387 = vmul.f32 %v1323, %v1323
        %v1388 = vmul.f32 %v1324, %v1324
        %v1389 = vmul.f32 %v1325, %v1325
        %v1390 = vmul.f32 %v1326, %v1326
        %v1391 = vmul.f32 %v1327, %v1327
        %v1392 = vmul.f32 %v1328, %v1328
        %v1393 = vmul.f32 %v1329, %v1329
        %v1394 = vmul.f32 %v1330, %v1330
        %v1395 = vmul.f32 %v1331, %v1331
        %v1396 = vmul.f32 %v1332, %v1332
        %v1397 = vmul.f32 %v1333, %v1333
        %v1398 = vmul.f32 %v1334, %v1334
        %v1399 = vmul.f32 %v1335, %v1335
        %v1400 = vmul.f32 %v1336, %v1336
        %v1401 = vmul.f32 %v1337, %v1337
        %v1402 = vmul.f32 %v1338, %v1338
        %v1403 = vmul.f32 %v1339, %v1339
        %v1404 = vmul.f32 %v1340, %v1340
        %v1405 = vmul.f32 %v1341, %v1341
        %v1406 = vmul.f32 %v1342, %v1342
        %v1407 = vmul.f32 %v1343, %v1343
        %v1408 = vmul.f32 %v1344, %v1344
        %v1409 = vmul.f32 %v1345, %v1345
        %v1410 = vmul.f32 %v1346, %v1346
        %v1411 = vmul.f32 %v1347, %v1347
        %v1412 = vmul.f32 %v1348, %v1348
        %v1413 = vmul.f32 %v1349, %v1349
        %v1414 = vmul.f32 %v1350, %v1350
        %v1415 = vmul.f32 %v1351, %v1351
        %v1416 = vmul.f32 %v1352, %v1352
        %v1417 = vmul.f32 %v1353, %v1353
        %v1418 = vmul.f32 %v1354, %v1354
        %v1419 = vmul.f32 %v1355, %v1355
        %v1420 = vmul.f32 %v1356, %v1356
        %v1421 = vmul.f32 %v1357, %v1357
        %v1422 = vsel %vm1036, %v1358, 0.0
        %1423 = vadd.xlane.f32.xlu0 %v1422
        %v1424 = vpop.xlane.xlu0 %1423
        %v1425 = vsel %vm1036, %v1359, 0.0
        %1426 = vadd.xlane.f32.xlu0 %v1425
        %v1427 = vpop.xlane.xlu0 %1426
        %v1428 = vsel %vm1036, %v1360, 0.0
        %1429 = vadd.xlane.f32.xlu0 %v1428
        %v1430 = vpop.xlane.xlu0 %1429
        %v1431 = vsel %vm1036, %v1361, 0.0
        %1432 = vadd.xlane.f32.xlu0 %v1431
        %v1433 = vpop.xlane.xlu0 %1432
        %v1434 = vsel %vm1036, %v1362, 0.0
        %1435 = vadd.xlane.f32.xlu0 %v1434
        %v1436 = vpop.xlane.xlu0 %1435
        %v1437 = vsel %vm1036, %v1363, 0.0
        %1438 = vadd.xlane.f32.xlu0 %v1437
        %v1439 = vpop.xlane.xlu0 %1438
        %v1440 = vsel %vm1036, %v1364, 0.0
        %1441 = vadd.xlane.f32.xlu0 %v1440
        %v1442 = vpop.xlane.xlu0 %1441
        %v1443 = vsel %vm1036, %v1365, 0.0
        %1444 = vadd.xlane.f32.xlu0 %v1443
        %v1445 = vpop.xlane.xlu0 %1444
        %v1446 = vsel %vm1036, %v1366, 0.0
        %1447 = vadd.xlane.f32.xlu0 %v1446
        %v1448 = vpop.xlane.xlu0 %1447
        %v1449 = vsel %vm1036, %v1367, 0.0
        %1450 = vadd.xlane.f32.xlu0 %v1449
        %v1451 = vpop.xlane.xlu0 %1450
        %v1452 = vsel %vm1036, %v1368, 0.0
        %1453 = vadd.xlane.f32.xlu0 %v1452
        %v1454 = vpop.xlane.xlu0 %1453
        %v1455 = vsel %vm1036, %v1369, 0.0
        %1456 = vadd.xlane.f32.xlu0 %v1455
        %v1457 = vpop.xlane.xlu0 %1456
        %v1458 = vsel %vm1036, %v1370, 0.0
        %1459 = vadd.xlane.f32.xlu0 %v1458
        %v1460 = vpop.xlane.xlu0 %1459
        %v1461 = vsel %vm1036, %v1371, 0.0
        %1462 = vadd.xlane.f32.xlu0 %v1461
        %v1463 = vpop.xlane.xlu0 %1462
        %v1464 = vsel %vm1036, %v1372, 0.0
        %1465 = vadd.xlane.f32.xlu0 %v1464
        %v1466 = vpop.xlane.xlu0 %1465
        %v1467 = vsel %vm1036, %v1373, 0.0
        %1468 = vadd.xlane.f32.xlu0 %v1467
        %v1469 = vpop.xlane.xlu0 %1468
        %v1470 = vsel %vm1036, %v1374, 0.0
        %1471 = vadd.xlane.f32.xlu0 %v1470
        %v1472 = vpop.xlane.xlu0 %1471
        %v1473 = vsel %vm1036, %v1375, 0.0
        %1474 = vadd.xlane.f32.xlu0 %v1473
        %v1475 = vpop.xlane.xlu0 %1474
        %v1476 = vsel %vm1036, %v1376, 0.0
        %1477 = vadd.xlane.f32.xlu0 %v1476
        %v1478 = vpop.xlane.xlu0 %1477
        %v1479 = vsel %vm1036, %v1377, 0.0
        %1480 = vadd.xlane.f32.xlu0 %v1479
        %v1481 = vpop.xlane.xlu0 %1480
        %v1482 = vsel %vm1036, %v1378, 0.0
        %1483 = vadd.xlane.f32.xlu0 %v1482
        %v1484 = vpop.xlane.xlu0 %1483
        %v1485 = vsel %vm1036, %v1379, 0.0
        %1486 = vadd.xlane.f32.xlu0 %v1485
        %v1487 = vpop.xlane.xlu0 %1486
        %v1488 = vsel %vm1036, %v1380, 0.0
        %1489 = vadd.xlane.f32.xlu0 %v1488
        %v1490 = vpop.xlane.xlu0 %1489
        %v1491 = vsel %vm1036, %v1381, 0.0
        %1492 = vadd.xlane.f32.xlu0 %v1491
        %v1493 = vpop.xlane.xlu0 %1492
        %v1494 = vsel %vm1036, %v1382, 0.0
        %1495 = vadd.xlane.f32.xlu0 %v1494
        %v1496 = vpop.xlane.xlu0 %1495
        %v1497 = vsel %vm1036, %v1383, 0.0
        %1498 = vadd.xlane.f32.xlu0 %v1497
        %v1499 = vpop.xlane.xlu0 %1498
        %v1500 = vsel %vm1036, %v1384, 0.0
        %1501 = vadd.xlane.f32.xlu0 %v1500
        %v1502 = vpop.xlane.xlu0 %1501
        %v1503 = vsel %vm1036, %v1385, 0.0
        %1504 = vadd.xlane.f32.xlu0 %v1503
        %v1505 = vpop.xlane.xlu0 %1504
        %v1506 = vsel %vm1036, %v1386, 0.0
        %1507 = vadd.xlane.f32.xlu0 %v1506
        %v1508 = vpop.xlane.xlu0 %1507
        %v1509 = vsel %vm1036, %v1387, 0.0
        %1510 = vadd.xlane.f32.xlu0 %v1509
        %v1511 = vpop.xlane.xlu0 %1510
        %v1512 = vsel %vm1036, %v1388, 0.0
        %1513 = vadd.xlane.f32.xlu0 %v1512
        %v1514 = vpop.xlane.xlu0 %1513
        %v1515 = vsel %vm1036, %v1389, 0.0
        %1516 = vadd.xlane.f32.xlu0 %v1515
        %v1517 = vpop.xlane.xlu0 %1516
        %v1518 = vsel %vm1036, %v1390, 0.0
        %1519 = vadd.xlane.f32.xlu0 %v1518
        %v1520 = vpop.xlane.xlu0 %1519
        %v1521 = vsel %vm1036, %v1391, 0.0
        %1522 = vadd.xlane.f32.xlu0 %v1521
        %v1523 = vpop.xlane.xlu0 %1522
        %v1524 = vsel %vm1036, %v1392, 0.0
        %1525 = vadd.xlane.f32.xlu0 %v1524
        %v1526 = vpop.xlane.xlu0 %1525
        %v1527 = vsel %vm1036, %v1393, 0.0
        %1528 = vadd.xlane.f32.xlu0 %v1527
        %v1529 = vpop.xlane.xlu0 %1528
        %v1530 = vsel %vm1036, %v1394, 0.0
        %1531 = vadd.xlane.f32.xlu0 %v1530
        %v1532 = vpop.xlane.xlu0 %1531
        %v1533 = vsel %vm1036, %v1395, 0.0
        %1534 = vadd.xlane.f32.xlu0 %v1533
        %v1535 = vpop.xlane.xlu0 %1534
        %v1536 = vsel %vm1036, %v1396, 0.0
        %1537 = vadd.xlane.f32.xlu0 %v1536
        %v1538 = vpop.xlane.xlu0 %1537
        %v1539 = vsel %vm1036, %v1397, 0.0
        %1540 = vadd.xlane.f32.xlu0 %v1539
        %v1541 = vpop.xlane.xlu0 %1540
        %v1542 = vsel %vm1036, %v1398, 0.0
        %1543 = vadd.xlane.f32.xlu0 %v1542
        %v1544 = vpop.xlane.xlu0 %1543
        %v1545 = vsel %vm1036, %v1399, 0.0
        %1546 = vadd.xlane.f32.xlu0 %v1545
        %v1547 = vpop.xlane.xlu0 %1546
        %v1548 = vsel %vm1036, %v1400, 0.0
        %1549 = vadd.xlane.f32.xlu0 %v1548
        %v1550 = vpop.xlane.xlu0 %1549
        %v1551 = vsel %vm1036, %v1401, 0.0
        %1552 = vadd.xlane.f32.xlu0 %v1551
        %v1553 = vpop.xlane.xlu0 %1552
        %v1554 = vsel %vm1036, %v1402, 0.0
        %1555 = vadd.xlane.f32.xlu0 %v1554
        %v1556 = vpop.xlane.xlu0 %1555
        %v1557 = vsel %vm1036, %v1403, 0.0
        %1558 = vadd.xlane.f32.xlu0 %v1557
        %v1559 = vpop.xlane.xlu0 %1558
        %v1560 = vsel %vm1036, %v1404, 0.0
        %1561 = vadd.xlane.f32.xlu0 %v1560
        %v1562 = vpop.xlane.xlu0 %1561
        %v1563 = vsel %vm1036, %v1405, 0.0
        %1564 = vadd.xlane.f32.xlu0 %v1563
        %v1565 = vpop.xlane.xlu0 %1564
        %v1566 = vsel %vm1036, %v1406, 0.0
        %1567 = vadd.xlane.f32.xlu0 %v1566
        %v1568 = vpop.xlane.xlu0 %1567
        %v1569 = vsel %vm1036, %v1407, 0.0
        %1570 = vadd.xlane.f32.xlu0 %v1569
        %v1571 = vpop.xlane.xlu0 %1570
        %v1572 = vsel %vm1036, %v1408, 0.0
        %1573 = vadd.xlane.f32.xlu0 %v1572
        %v1574 = vpop.xlane.xlu0 %1573
        %v1575 = vsel %vm1036, %v1409, 0.0
        %1576 = vadd.xlane.f32.xlu0 %v1575
        %v1577 = vpop.xlane.xlu0 %1576
        %v1578 = vsel %vm1036, %v1410, 0.0
        %1579 = vadd.xlane.f32.xlu0 %v1578
        %v1580 = vpop.xlane.xlu0 %1579
        %v1581 = vsel %vm1036, %v1411, 0.0
        %1582 = vadd.xlane.f32.xlu0 %v1581
        %v1583 = vpop.xlane.xlu0 %1582
        %v1584 = vsel %vm1036, %v1412, 0.0
        %1585 = vadd.xlane.f32.xlu0 %v1584
        %v1586 = vpop.xlane.xlu0 %1585
        %v1587 = vsel %vm1036, %v1413, 0.0
        %1588 = vadd.xlane.f32.xlu0 %v1587
        %v1589 = vpop.xlane.xlu0 %1588
        %v1590 = vsel %vm1036, %v1414, 0.0
        %1591 = vadd.xlane.f32.xlu0 %v1590
        %v1592 = vpop.xlane.xlu0 %1591
        %v1593 = vsel %vm1036, %v1415, 0.0
        %1594 = vadd.xlane.f32.xlu0 %v1593
        %v1595 = vpop.xlane.xlu0 %1594
        %v1596 = vsel %vm1036, %v1416, 0.0
        %1597 = vadd.xlane.f32.xlu0 %v1596
        %v1598 = vpop.xlane.xlu0 %1597
        %v1599 = vsel %vm1036, %v1417, 0.0
        %1600 = vadd.xlane.f32.xlu0 %v1599
        %v1601 = vpop.xlane.xlu0 %1600
        %v1602 = vsel %vm1036, %v1418, 0.0
        %1603 = vadd.xlane.f32.xlu0 %v1602
        %v1604 = vpop.xlane.xlu0 %1603
        %v1605 = vsel %vm1036, %v1419, 0.0
        %1606 = vadd.xlane.f32.xlu0 %v1605
        %v1607 = vpop.xlane.xlu0 %1606
        %v1608 = vsel %vm1036, %v1420, 0.0
        %1609 = vadd.xlane.f32.xlu0 %v1608
        %v1610 = vpop.xlane.xlu0 %1609
        %v1611 = vsel %vm1036, %v1421, 0.0
        %1612 = vadd.xlane.f32.xlu0 %v1611
        %v1613 = vpop.xlane.xlu0 %1612
        %v1614 = vmul.f32 %v1424, %v1229
        %v1615 = vmul.f32 %v1427, %v1229
        %v1616 = vmul.f32 %v1430, %v1229
        %v1617 = vmul.f32 %v1433, %v1229
        %v1618 = vmul.f32 %v1436, %v1229
        %v1619 = vmul.f32 %v1439, %v1229
        %v1620 = vmul.f32 %v1442, %v1229
        %v1621 = vmul.f32 %v1445, %v1229
        %v1622 = vmul.f32 %v1448, %v1229
        %v1623 = vmul.f32 %v1451, %v1229
        %v1624 = vmul.f32 %v1454, %v1229
        %v1625 = vmul.f32 %v1457, %v1229
        %v1626 = vmul.f32 %v1460, %v1229
        %v1627 = vmul.f32 %v1463, %v1229
        %v1628 = vmul.f32 %v1466, %v1229
        %v1629 = vmul.f32 %v1469, %v1229
        %v1630 = vmul.f32 %v1472, %v1229
        %v1631 = vmul.f32 %v1475, %v1229
        %v1632 = vmul.f32 %v1478, %v1229
        %v1633 = vmul.f32 %v1481, %v1229
        %v1634 = vmul.f32 %v1484, %v1229
        %v1635 = vmul.f32 %v1487, %v1229
        %v1636 = vmul.f32 %v1490, %v1229
        %v1637 = vmul.f32 %v1493, %v1229
        %v1638 = vmul.f32 %v1496, %v1229
        %v1639 = vmul.f32 %v1499, %v1229
        %v1640 = vmul.f32 %v1502, %v1229
        %v1641 = vmul.f32 %v1505, %v1229
        %v1642 = vmul.f32 %v1508, %v1229
        %v1643 = vmul.f32 %v1511, %v1229
        %v1644 = vmul.f32 %v1514, %v1229
        %v1645 = vmul.f32 %v1517, %v1229
        %v1646 = vmul.f32 %v1520, %v1229
        %v1647 = vmul.f32 %v1523, %v1229
        %v1648 = vmul.f32 %v1526, %v1229
        %v1649 = vmul.f32 %v1529, %v1229
        %v1650 = vmul.f32 %v1532, %v1229
        %v1651 = vmul.f32 %v1535, %v1229
        %v1652 = vmul.f32 %v1538, %v1229
        %v1653 = vmul.f32 %v1541, %v1229
        %v1654 = vmul.f32 %v1544, %v1229
        %v1655 = vmul.f32 %v1547, %v1229
        %v1656 = vmul.f32 %v1550, %v1229
        %v1657 = vmul.f32 %v1553, %v1229
        %v1658 = vmul.f32 %v1556, %v1229
        %v1659 = vmul.f32 %v1559, %v1229
        %v1660 = vmul.f32 %v1562, %v1229
        %v1661 = vmul.f32 %v1565, %v1229
        %v1662 = vmul.f32 %v1568, %v1229
        %v1663 = vmul.f32 %v1571, %v1229
        %v1664 = vmul.f32 %v1574, %v1229
        %v1665 = vmul.f32 %v1577, %v1229
        %v1666 = vmul.f32 %v1580, %v1229
        %v1667 = vmul.f32 %v1583, %v1229
        %v1668 = vmul.f32 %v1586, %v1229
        %v1669 = vmul.f32 %v1589, %v1229
        %v1670 = vmul.f32 %v1592, %v1229
        %v1671 = vmul.f32 %v1595, %v1229
        %v1672 = vmul.f32 %v1598, %v1229
        %v1673 = vmul.f32 %v1601, %v1229
        %v1674 = vmul.f32 %v1604, %v1229
        %v1675 = vmul.f32 %v1607, %v1229
        %v1676 = vmul.f32 %v1610, %v1229
        %v1677 = vmul.f32 %v1613, %v1229
        %v1678 = vadd.f32 %v1614, 1e-05
        %v1679 = vadd.f32 %v1615, 1e-05
        %v1680 = vadd.f32 %v1616, 1e-05
        %v1681 = vadd.f32 %v1617, 1e-05
        %v1682 = vadd.f32 %v1618, 1e-05
        %v1683 = vadd.f32 %v1619, 1e-05
        %v1684 = vadd.f32 %v1620, 1e-05
        %v1685 = vadd.f32 %v1621, 1e-05
        %v1686 = vadd.f32 %v1622, 1e-05
        %v1687 = vadd.f32 %v1623, 1e-05
        %v1688 = vadd.f32 %v1624, 1e-05
        %v1689 = vadd.f32 %v1625, 1e-05
        %v1690 = vadd.f32 %v1626, 1e-05
        %v1691 = vadd.f32 %v1627, 1e-05
        %v1692 = vadd.f32 %v1628, 1e-05
        %v1693 = vadd.f32 %v1629, 1e-05
        %v1694 = vadd.f32 %v1630, 1e-05
        %v1695 = vadd.f32 %v1631, 1e-05
        %v1696 = vadd.f32 %v1632, 1e-05
        %v1697 = vadd.f32 %v1633, 1e-05
        %v1698 = vadd.f32 %v1634, 1e-05
        %v1699 = vadd.f32 %v1635, 1e-05
        %v1700 = vadd.f32 %v1636, 1e-05
        %v1701 = vadd.f32 %v1637, 1e-05
        %v1702 = vadd.f32 %v1638, 1e-05
        %v1703 = vadd.f32 %v1639, 1e-05
        %v1704 = vadd.f32 %v1640, 1e-05
        %v1705 = vadd.f32 %v1641, 1e-05
        %v1706 = vadd.f32 %v1642, 1e-05
        %v1707 = vadd.f32 %v1643, 1e-05
        %v1708 = vadd.f32 %v1644, 1e-05
        %v1709 = vadd.f32 %v1645, 1e-05
        %v1710 = vadd.f32 %v1646, 1e-05
        %v1711 = vadd.f32 %v1647, 1e-05
        %v1712 = vadd.f32 %v1648, 1e-05
        %v1713 = vadd.f32 %v1649, 1e-05
        %v1714 = vadd.f32 %v1650, 1e-05
        %v1715 = vadd.f32 %v1651, 1e-05
        %v1716 = vadd.f32 %v1652, 1e-05
        %v1717 = vadd.f32 %v1653, 1e-05
        %v1718 = vadd.f32 %v1654, 1e-05
        %v1719 = vadd.f32 %v1655, 1e-05
        %v1720 = vadd.f32 %v1656, 1e-05
        %v1721 = vadd.f32 %v1657, 1e-05
        %v1722 = vadd.f32 %v1658, 1e-05
        %v1723 = vadd.f32 %v1659, 1e-05
        %v1724 = vadd.f32 %v1660, 1e-05
        %v1725 = vadd.f32 %v1661, 1e-05
        %v1726 = vadd.f32 %v1662, 1e-05
        %v1727 = vadd.f32 %v1663, 1e-05
        %v1728 = vadd.f32 %v1664, 1e-05
        %v1729 = vadd.f32 %v1665, 1e-05
        %v1730 = vadd.f32 %v1666, 1e-05
        %v1731 = vadd.f32 %v1667, 1e-05
        %v1732 = vadd.f32 %v1668, 1e-05
        %v1733 = vadd.f32 %v1669, 1e-05
        %v1734 = vadd.f32 %v1670, 1e-05
        %v1735 = vadd.f32 %v1671, 1e-05
        %v1736 = vadd.f32 %v1672, 1e-05
        %v1737 = vadd.f32 %v1673, 1e-05
        %v1738 = vadd.f32 %v1674, 1e-05
        %v1739 = vadd.f32 %v1675, 1e-05
        %v1740 = vadd.f32 %v1676, 1e-05
        %v1741 = vadd.f32 %v1677, 1e-05
        %v1742 = vrsqrt.pop %v1678
        %v1743 = vrsqrt.pop %v1679
        %v1744 = vrsqrt.pop %v1680
        %v1745 = vrsqrt.pop %v1681
        %v1746 = vrsqrt.pop %v1682
        %v1747 = vrsqrt.pop %v1683
        %v1748 = vrsqrt.pop %v1684
        %v1749 = vrsqrt.pop %v1685
        %v1750 = vrsqrt.pop %v1686
        %v1751 = vrsqrt.pop %v1687
        %v1752 = vrsqrt.pop %v1688
        %v1753 = vrsqrt.pop %v1689
        %v1754 = vrsqrt.pop %v1690
        %v1755 = vrsqrt.pop %v1691
        %v1756 = vrsqrt.pop %v1692
        %v1757 = vrsqrt.pop %v1693
        %v1758 = vrsqrt.pop %v1694
        %v1759 = vrsqrt.pop %v1695
        %v1760 = vrsqrt.pop %v1696
        %v1761 = vrsqrt.pop %v1697
        %v1762 = vrsqrt.pop %v1698
        %v1763 = vrsqrt.pop %v1699
        %v1764 = vrsqrt.pop %v1700
        %v1765 = vrsqrt.pop %v1701
        %v1766 = vrsqrt.pop %v1702
        %v1767 = vrsqrt.pop %v1703
        %v1768 = vrsqrt.pop %v1704
        %v1769 = vrsqrt.pop %v1705
        %v1770 = vrsqrt.pop %v1706
        %v1771 = vrsqrt.pop %v1707
        %v1772 = vrsqrt.pop %v1708
        %v1773 = vrsqrt.pop %v1709
        %v1774 = vrsqrt.pop %v1710
        %v1775 = vrsqrt.pop %v1711
        %v1776 = vrsqrt.pop %v1712
        %v1777 = vrsqrt.pop %v1713
        %v1778 = vrsqrt.pop %v1714
        %v1779 = vrsqrt.pop %v1715
        %v1780 = vrsqrt.pop %v1716
        %v1781 = vrsqrt.pop %v1717
        %v1782 = vrsqrt.pop %v1718
        %v1783 = vrsqrt.pop %v1719
        %v1784 = vrsqrt.pop %v1720
        %v1785 = vrsqrt.pop %v1721
        %v1786 = vrsqrt.pop %v1722
        %v1787 = vrsqrt.pop %v1723
        %v1788 = vrsqrt.pop %v1724
        %v1789 = vrsqrt.pop %v1725
        %v1790 = vrsqrt.pop %v1726
        %v1791 = vrsqrt.pop %v1727
        %v1792 = vrsqrt.pop %v1728
        %v1793 = vrsqrt.pop %v1729
        %v1794 = vrsqrt.pop %v1730
        %v1795 = vrsqrt.pop %v1731
        %v1796 = vrsqrt.pop %v1732
        %v1797 = vrsqrt.pop %v1733
        %v1798 = vrsqrt.pop %v1734
        %v1799 = vrsqrt.pop %v1735
        %v1800 = vrsqrt.pop %v1736
        %v1801 = vrsqrt.pop %v1737
        %v1802 = vrsqrt.pop %v1738
        %v1803 = vrsqrt.pop %v1739
        %v1804 = vrsqrt.pop %v1740
        %v1805 = vrsqrt.pop %v1741
        %v1806 = vld [vmem:[%s2] sm:$0x1]
        %v1807 = vld [vmem:[%s3] sm:$0x1]
        %v1808 = vmul.f32 %v1294, %v1742
        %v1809 = vmul.f32 %v1295, %v1743
        %v1810 = vmul.f32 %v1296, %v1744
        %v1811 = vmul.f32 %v1297, %v1745
        %v1812 = vmul.f32 %v1298, %v1746
        %v1813 = vmul.f32 %v1299, %v1747
        %v1814 = vmul.f32 %v1300, %v1748
        %v1815 = vmul.f32 %v1301, %v1749
        %v1816 = vmul.f32 %v1302, %v1750
        %v1817 = vmul.f32 %v1303, %v1751
        %v1818 = vmul.f32 %v1304, %v1752
        %v1819 = vmul.f32 %v1305, %v1753
        %v1820 = vmul.f32 %v1306, %v1754
        %v1821 = vmul.f32 %v1307, %v1755
        %v1822 = vmul.f32 %v1308, %v1756
        %v1823 = vmul.f32 %v1309, %v1757
        %v1824 = vmul.f32 %v1310, %v1758
        %v1825 = vmul.f32 %v1311, %v1759
        %v1826 = vmul.f32 %v1312, %v1760
        %v1827 = vmul.f32 %v1313, %v1761
        %v1828 = vmul.f32 %v1314, %v1762
        %v1829 = vmul.f32 %v1315, %v1763
        %v1830 = vmul.f32 %v1316, %v1764
        %v1831 = vmul.f32 %v1317, %v1765
        %v1832 = vmul.f32 %v1318, %v1766
        %v1833 = vmul.f32 %v1319, %v1767
        %v1834 = vmul.f32 %v1320, %v1768
        %v1835 = vmul.f32 %v1321, %v1769
        %v1836 = vmul.f32 %v1322, %v1770
        %v1837 = vmul.f32 %v1323, %v1771
        %v1838 = vmul.f32 %v1324, %v1772
        %v1839 = vmul.f32 %v1325, %v1773
        %v1840 = vmul.f32 %v1326, %v1774
        %v1841 = vmul.f32 %v1327, %v1775
        %v1842 = vmul.f32 %v1328, %v1776
        %v1843 = vmul.f32 %v1329, %v1777
        %v1844 = vmul.f32 %v1330, %v1778
        %v1845 = vmul.f32 %v1331, %v1779
        %v1846 = vmul.f32 %v1332, %v1780
        %v1847 = vmul.f32 %v1333, %v1781
        %v1848 = vmul.f32 %v1334, %v1782
        %v1849 = vmul.f32 %v1335, %v1783
        %v1850 = vmul.f32 %v1336, %v1784
        %v1851 = vmul.f32 %v1337, %v1785
        %v1852 = vmul.f32 %v1338, %v1786
        %v1853 = vmul.f32 %v1339, %v1787
        %v1854 = vmul.f32 %v1340, %v1788
        %v1855 = vmul.f32 %v1341, %v1789
        %v1856 = vmul.f32 %v1342, %v1790
        %v1857 = vmul.f32 %v1343, %v1791
        %v1858 = vmul.f32 %v1344, %v1792
        %v1859 = vmul.f32 %v1345, %v1793
        %v1860 = vmul.f32 %v1346, %v1794
        %v1861 = vmul.f32 %v1347, %v1795
        %v1862 = vmul.f32 %v1348, %v1796
        %v1863 = vmul.f32 %v1349, %v1797
        %v1864 = vmul.f32 %v1350, %v1798
        %v1865 = vmul.f32 %v1351, %v1799
        %v1866 = vmul.f32 %v1352, %v1800
        %v1867 = vmul.f32 %v1353, %v1801
        %v1868 = vmul.f32 %v1354, %v1802
        %v1869 = vmul.f32 %v1355, %v1803
        %v1870 = vmul.f32 %v1356, %v1804
        %v1871 = vmul.f32 %v1357, %v1805
        %v1873 = vlaneseq
        %v1874 = vshrl.u32 %v1873, 7
        %v1875 = vsub.s32 0, %v1874
        %v1876 = vrot.slane %v1806, %v1875
        %v1878 = vmul.f32 %v1808, %v1876
        %v1879 = vmul.f32 %v1809, %v1876
        %v1880 = vmul.f32 %v1810, %v1876
        %v1881 = vmul.f32 %v1811, %v1876
        %v1882 = vmul.f32 %v1812, %v1876
        %v1883 = vmul.f32 %v1813, %v1876
        %v1884 = vmul.f32 %v1814, %v1876
        %v1885 = vmul.f32 %v1815, %v1876
        %v1886 = vmul.f32 %v1816, %v1876
        %v1887 = vmul.f32 %v1817, %v1876
        %v1888 = vmul.f32 %v1818, %v1876
        %v1889 = vmul.f32 %v1819, %v1876
        %v1890 = vmul.f32 %v1820, %v1876
        %v1891 = vmul.f32 %v1821, %v1876
        %v1892 = vmul.f32 %v1822, %v1876
        %v1893 = vmul.f32 %v1823, %v1876
        %v1894 = vmul.f32 %v1824, %v1876
        %v1895 = vmul.f32 %v1825, %v1876
        %v1896 = vmul.f32 %v1826, %v1876
        %v1897 = vmul.f32 %v1827, %v1876
        %v1898 = vmul.f32 %v1828, %v1876
        %v1899 = vmul.f32 %v1829, %v1876
        %v1900 = vmul.f32 %v1830, %v1876
        %v1901 = vmul.f32 %v1831, %v1876
        %v1902 = vmul.f32 %v1832, %v1876
        %v1903 = vmul.f32 %v1833, %v1876
        %v1904 = vmul.f32 %v1834, %v1876
        %v1905 = vmul.f32 %v1835, %v1876
        %v1906 = vmul.f32 %v1836, %v1876
        %v1907 = vmul.f32 %v1837, %v1876
        %v1908 = vmul.f32 %v1838, %v1876
        %v1909 = vmul.f32 %v1839, %v1876
        %v1910 = vmul.f32 %v1840, %v1876
        %v1911 = vmul.f32 %v1841, %v1876
        %v1912 = vmul.f32 %v1842, %v1876
        %v1913 = vmul.f32 %v1843, %v1876
        %v1914 = vmul.f32 %v1844, %v1876
        %v1915 = vmul.f32 %v1845, %v1876
        %v1916 = vmul.f32 %v1846, %v1876
        %v1917 = vmul.f32 %v1847, %v1876
        %v1918 = vmul.f32 %v1848, %v1876
        %v1919 = vmul.f32 %v1849, %v1876
        %v1920 = vmul.f32 %v1850, %v1876
        %v1921 = vmul.f32 %v1851, %v1876
        %v1922 = vmul.f32 %v1852, %v1876
        %v1923 = vmul.f32 %v1853, %v1876
        %v1924 = vmul.f32 %v1854, %v1876
        %v1925 = vmul.f32 %v1855, %v1876
        %v1926 = vmul.f32 %v1856, %v1876
        %v1927 = vmul.f32 %v1857, %v1876
        %v1928 = vmul.f32 %v1858, %v1876
        %v1929 = vmul.f32 %v1859, %v1876
        %v1930 = vmul.f32 %v1860, %v1876
        %v1931 = vmul.f32 %v1861, %v1876
        %v1932 = vmul.f32 %v1862, %v1876
        %v1933 = vmul.f32 %v1863, %v1876
        %v1934 = vmul.f32 %v1864, %v1876
        %v1935 = vmul.f32 %v1865, %v1876
        %v1936 = vmul.f32 %v1866, %v1876
        %v1937 = vmul.f32 %v1867, %v1876
        %v1938 = vmul.f32 %v1868, %v1876
        %v1939 = vmul.f32 %v1869, %v1876
        %v1940 = vmul.f32 %v1870, %v1876
        %v1941 = vmul.f32 %v1871, %v1876
        %v1943 = vlaneseq
        %v1944 = vshrl.u32 %v1943, 7
        %v1945 = vsub.s32 0, %v1944
        %v1946 = vrot.slane %v1807, %v1945
        %v1948 = vadd.f32 %v1878, %v1946
        %v1949 = vadd.f32 %v1879, %v1946
        %v1950 = vadd.f32 %v1880, %v1946
        %v1951 = vadd.f32 %v1881, %v1946
        %v1952 = vadd.f32 %v1882, %v1946
        %v1953 = vadd.f32 %v1883, %v1946
        %v1954 = vadd.f32 %v1884, %v1946
        %v1955 = vadd.f32 %v1885, %v1946
        %v1956 = vadd.f32 %v1886, %v1946
        %v1957 = vadd.f32 %v1887, %v1946
        %v1958 = vadd.f32 %v1888, %v1946
        %v1959 = vadd.f32 %v1889, %v1946
        %v1960 = vadd.f32 %v1890, %v1946
        %v1961 = vadd.f32 %v1891, %v1946
        %v1962 = vadd.f32 %v1892, %v1946
        %v1963 = vadd.f32 %v1893, %v1946
        %v1964 = vadd.f32 %v1894, %v1946
        %v1965 = vadd.f32 %v1895, %v1946
        %v1966 = vadd.f32 %v1896, %v1946
        %v1967 = vadd.f32 %v1897, %v1946
        %v1968 = vadd.f32 %v1898, %v1946
        %v1969 = vadd.f32 %v1899, %v1946
        %v1970 = vadd.f32 %v1900, %v1946
        %v1971 = vadd.f32 %v1901, %v1946
        %v1972 = vadd.f32 %v1902, %v1946
        %v1973 = vadd.f32 %v1903, %v1946
        %v1974 = vadd.f32 %v1904, %v1946
        %v1975 = vadd.f32 %v1905, %v1946
        %v1976 = vadd.f32 %v1906, %v1946
        %v1977 = vadd.f32 %v1907, %v1946
        %v1978 = vadd.f32 %v1908, %v1946
        %v1979 = vadd.f32 %v1909, %v1946
        %v1980 = vadd.f32 %v1910, %v1946
        %v1981 = vadd.f32 %v1911, %v1946
        %v1982 = vadd.f32 %v1912, %v1946
        %v1983 = vadd.f32 %v1913, %v1946
        %v1984 = vadd.f32 %v1914, %v1946
        %v1985 = vadd.f32 %v1915, %v1946
        %v1986 = vadd.f32 %v1916, %v1946
        %v1987 = vadd.f32 %v1917, %v1946
        %v1988 = vadd.f32 %v1918, %v1946
        %v1989 = vadd.f32 %v1919, %v1946
        %v1990 = vadd.f32 %v1920, %v1946
        %v1991 = vadd.f32 %v1921, %v1946
        %v1992 = vadd.f32 %v1922, %v1946
        %v1993 = vadd.f32 %v1923, %v1946
        %v1994 = vadd.f32 %v1924, %v1946
        %v1995 = vadd.f32 %v1925, %v1946
        %v1996 = vadd.f32 %v1926, %v1946
        %v1997 = vadd.f32 %v1927, %v1946
        %v1998 = vadd.f32 %v1928, %v1946
        %v1999 = vadd.f32 %v1929, %v1946
        %v2000 = vadd.f32 %v1930, %v1946
        %v2001 = vadd.f32 %v1931, %v1946
        %v2002 = vadd.f32 %v1932, %v1946
        %v2003 = vadd.f32 %v1933, %v1946
        %v2004 = vadd.f32 %v1934, %v1946
        %v2005 = vadd.f32 %v1935, %v1946
        %v2006 = vadd.f32 %v1936, %v1946
        %v2007 = vadd.f32 %v1937, %v1946
        %v2008 = vadd.f32 %v1938, %v1946
        %v2009 = vadd.f32 %v1939, %v1946
        %v2010 = vadd.f32 %v1940, %v1946
        %v2011 = vadd.f32 %v1941, %v1946
        %v2012 = vcombine.low %v1948, %v1950
        %v2014 = vunpack.c.l.s4 1983009808
        %v2015 = vunpack.c.0.s8 %v2014
        %v2016 = vlaneseq
        %v2017 = vshrl.u32 %v2016, 7
        %v2018 = vsub.s32 %v2015, %v2017
        %v2019 = vrot.slane %v2012, %v2018
        %v2020 = vcombine.low %v1949, %v1951
        %v2022 = vunpack.c.l.s4 1983009808
        %v2023 = vunpack.c.0.s8 %v2022
        %v2024 = vlaneseq
        %v2025 = vshrl.u32 %v2024, 7
        %v2026 = vsub.s32 %v2023, %v2025
        %v2027 = vrot.slane %v2020, %v2026
        %v2028 = vcombine.low %v1952, %v1954
        %v2030 = vunpack.c.l.s4 1983009808
        %v2031 = vunpack.c.0.s8 %v2030
        %v2032 = vlaneseq
        %v2033 = vshrl.u32 %v2032, 7
        %v2034 = vsub.s32 %v2031, %v2033
        %v2035 = vrot.slane %v2028, %v2034
        %v2036 = vcombine.low %v1953, %v1955
        %v2038 = vunpack.c.l.s4 1983009808
        %v2039 = vunpack.c.0.s8 %v2038
        %v2040 = vlaneseq
        %v2041 = vshrl.u32 %v2040, 7
        %v2042 = vsub.s32 %v2039, %v2041
        %v2043 = vrot.slane %v2036, %v2042
        %v2044 = vcombine.low %v2019, %v2027
        %v2045 = vcombine.high %v2019, %v2027
        %v2047 = vunpack.c.l.s4 1934713408
        %v2048 = vunpack.c.0.s8 %v2047
        %v2049 = vlaneseq
        %v2050 = vshrl.u32 %v2049, 7
        %v2051 = vsub.s32 %v2048, %v2050
        %v2052 = vrot.slane %v2044, %v2051
        %v2054 = vunpack.c.l.s4 1934713408
        %v2055 = vunpack.c.0.s8 %v2054
        %v2056 = vlaneseq
        %v2057 = vshrl.u32 %v2056, 7
        %v2058 = vsub.s32 %v2055, %v2057
        %v2059 = vrot.slane %v2045, %v2058
        %v2060 = vcombine.low %v2035, %v2043
        %v2061 = vcombine.high %v2035, %v2043
        %v2063 = vunpack.c.l.s4 1934713408
        %v2064 = vunpack.c.0.s8 %v2063
        %v2065 = vlaneseq
        %v2066 = vshrl.u32 %v2065, 7
        %v2067 = vsub.s32 %v2064, %v2066
        %v2068 = vrot.slane %v2060, %v2067
        %v2070 = vunpack.c.l.s4 1934713408
        %v2071 = vunpack.c.0.s8 %v2070
        %v2072 = vlaneseq
        %v2073 = vshrl.u32 %v2072, 7
        %v2074 = vsub.s32 %v2071, %v2073
        %v2075 = vrot.slane %v2061, %v2074
        %v2076 = vcombine.low %v2052, %v2068
        %v2077 = vcombine.high %v2052, %v2068
        %v2078 = vcombine.low %v2059, %v2075
        %v2079 = vcombine.high %v2059, %v2075
        %v2080 = vcombine.low %v1956, %v1958
        %v2082 = vunpack.c.l.s4 1983009808
        %v2083 = vunpack.c.0.s8 %v2082
        %v2084 = vlaneseq
        %v2085 = vshrl.u32 %v2084, 7
        %v2086 = vsub.s32 %v2083, %v2085
        %v2087 = vrot.slane %v2080, %v2086
        %v2088 = vcombine.low %v1957, %v1959
        %v2090 = vunpack.c.l.s4 1983009808
        %v2091 = vunpack.c.0.s8 %v2090
        %v2092 = vlaneseq
        %v2093 = vshrl.u32 %v2092, 7
        %v2094 = vsub.s32 %v2091, %v2093
        %v2095 = vrot.slane %v2088, %v2094
        %v2096 = vcombine.low %v1960, %v1962
        %v2098 = vunpack.c.l.s4 1983009808
        %v2099 = vunpack.c.0.s8 %v2098
        %v2100 = vlaneseq
        %v2101 = vshrl.u32 %v2100, 7
        %v2102 = vsub.s32 %v2099, %v2101
        %v2103 = vrot.slane %v2096, %v2102
        %v2104 = vcombine.low %v1961, %v1963
        %v2106 = vunpack.c.l.s4 1983009808
        %v2107 = vunpack.c.0.s8 %v2106
        %v2108 = vlaneseq
        %v2109 = vshrl.u32 %v2108, 7
        %v2110 = vsub.s32 %v2107, %v2109
        %v2111 = vrot.slane %v2104, %v2110
        %v2112 = vcombine.low %v2087, %v2095
        %v2113 = vcombine.high %v2087, %v2095
        %v2115 = vunpack.c.l.s4 1934713408
        %v2116 = vunpack.c.0.s8 %v2115
        %v2117 = vlaneseq
        %v2118 = vshrl.u32 %v2117, 7
        %v2119 = vsub.s32 %v2116, %v2118
        %v2120 = vrot.slane %v2112, %v2119
        %v2122 = vunpack.c.l.s4 1934713408
        %v2123 = vunpack.c.0.s8 %v2122
        %v2124 = vlaneseq
        %v2125 = vshrl.u32 %v2124, 7
        %v2126 = vsub.s32 %v2123, %v2125
        %v2127 = vrot.slane %v2113, %v2126
        %v2128 = vcombine.low %v2103, %v2111
        %v2129 = vcombine.high %v2103, %v2111
        %v2131 = vunpack.c.l.s4 1934713408
        %v2132 = vunpack.c.0.s8 %v2131
        %v2133 = vlaneseq
        %v2134 = vshrl.u32 %v2133, 7
        %v2135 = vsub.s32 %v2132, %v2134
        %v2136 = vrot.slane %v2128, %v2135
        %v2138 = vunpack.c.l.s4 1934713408
        %v2139 = vunpack.c.0.s8 %v2138
        %v2140 = vlaneseq
        %v2141 = vshrl.u32 %v2140, 7
        %v2142 = vsub.s32 %v2139, %v2141
        %v2143 = vrot.slane %v2129, %v2142
        %v2144 = vcombine.low %v2120, %v2136
        %v2145 = vcombine.high %v2120, %v2136
        %v2146 = vcombine.low %v2127, %v2143
        %v2147 = vcombine.high %v2127, %v2143
        %v2148 = vcombine.low %v1964, %v1966
        %v2150 = vunpack.c.l.s4 1983009808
        %v2151 = vunpack.c.0.s8 %v2150
        %v2152 = vlaneseq
        %v2153 = vshrl.u32 %v2152, 7
        %v2154 = vsub.s32 %v2151, %v2153
        %v2155 = vrot.slane %v2148, %v2154
        %v2156 = vcombine.low %v1965, %v1967
        %v2158 = vunpack.c.l.s4 1983009808
        %v2159 = vunpack.c.0.s8 %v2158
        %v2160 = vlaneseq
        %v2161 = vshrl.u32 %v2160, 7
        %v2162 = vsub.s32 %v2159, %v2161
        %v2163 = vrot.slane %v2156, %v2162
        %v2164 = vcombine.low %v1968, %v1970
        %v2166 = vunpack.c.l.s4 1983009808
        %v2167 = vunpack.c.0.s8 %v2166
        %v2168 = vlaneseq
        %v2169 = vshrl.u32 %v2168, 7
        %v2170 = vsub.s32 %v2167, %v2169
        %v2171 = vrot.slane %v2164, %v2170
        %v2172 = vcombine.low %v1969, %v1971
        %v2174 = vunpack.c.l.s4 1983009808
        %v2175 = vunpack.c.0.s8 %v2174
        %v2176 = vlaneseq
        %v2177 = vshrl.u32 %v2176, 7
        %v2178 = vsub.s32 %v2175, %v2177
        %v2179 = vrot.slane %v2172, %v2178
        %v2180 = vcombine.low %v2155, %v2163
        %v2181 = vcombine.high %v2155, %v2163
        %v2183 = vunpack.c.l.s4 1934713408
        %v2184 = vunpack.c.0.s8 %v2183
        %v2185 = vlaneseq
        %v2186 = vshrl.u32 %v2185, 7
        %v2187 = vsub.s32 %v2184, %v2186
        %v2188 = vrot.slane %v2180, %v2187
        %v2190 = vunpack.c.l.s4 1934713408
        %v2191 = vunpack.c.0.s8 %v2190
        %v2192 = vlaneseq
        %v2193 = vshrl.u32 %v2192, 7
        %v2194 = vsub.s32 %v2191, %v2193
        %v2195 = vrot.slane %v2181, %v2194
        %v2196 = vcombine.low %v2171, %v2179
        %v2197 = vcombine.high %v2171, %v2179
        %v2199 = vunpack.c.l.s4 1934713408
        %v2200 = vunpack.c.0.s8 %v2199
        %v2201 = vlaneseq
        %v2202 = vshrl.u32 %v2201, 7
        %v2203 = vsub.s32 %v2200, %v2202
        %v2204 = vrot.slane %v2196, %v2203
        %v2206 = vunpack.c.l.s4 1934713408
        %v2207 = vunpack.c.0.s8 %v2206
        %v2208 = vlaneseq
        %v2209 = vshrl.u32 %v2208, 7
        %v2210 = vsub.s32 %v2207, %v2209
        %v2211 = vrot.slane %v2197, %v2210
        %v2212 = vcombine.low %v2188, %v2204
        %v2213 = vcombine.high %v2188, %v2204
        %v2214 = vcombine.low %v2195, %v2211
        %v2215 = vcombine.high %v2195, %v2211
        %v2216 = vcombine.low %v1972, %v1974
        %v2218 = vunpack.c.l.s4 1983009808
        %v2219 = vunpack.c.0.s8 %v2218
        %v2220 = vlaneseq
        %v2221 = vshrl.u32 %v2220, 7
        %v2222 = vsub.s32 %v2219, %v2221
        %v2223 = vrot.slane %v2216, %v2222
        %v2224 = vcombine.low %v1973, %v1975
        %v2226 = vunpack.c.l.s4 1983009808
        %v2227 = vunpack.c.0.s8 %v2226
        %v2228 = vlaneseq
        %v2229 = vshrl.u32 %v2228, 7
        %v2230 = vsub.s32 %v2227, %v2229
        %v2231 = vrot.slane %v2224, %v2230
        %v2232 = vcombine.low %v1976, %v1978
        %v2234 = vunpack.c.l.s4 1983009808
        %v2235 = vunpack.c.0.s8 %v2234
        %v2236 = vlaneseq
        %v2237 = vshrl.u32 %v2236, 7
        %v2238 = vsub.s32 %v2235, %v2237
        %v2239 = vrot.slane %v2232, %v2238
        %v2240 = vcombine.low %v1977, %v1979
        %v2242 = vunpack.c.l.s4 1983009808
        %v2243 = vunpack.c.0.s8 %v2242
        %v2244 = vlaneseq
        %v2245 = vshrl.u32 %v2244, 7
        %v2246 = vsub.s32 %v2243, %v2245
        %v2247 = vrot.slane %v2240, %v2246
        %v2248 = vcombine.low %v2223, %v2231
        %v2249 = vcombine.high %v2223, %v2231
        %v2251 = vunpack.c.l.s4 1934713408
        %v2252 = vunpack.c.0.s8 %v2251
        %v2253 = vlaneseq
        %v2254 = vshrl.u32 %v2253, 7
        %v2255 = vsub.s32 %v2252, %v2254
        %v2256 = vrot.slane %v2248, %v2255
        %v2258 = vunpack.c.l.s4 1934713408
        %v2259 = vunpack.c.0.s8 %v2258
        %v2260 = vlaneseq
        %v2261 = vshrl.u32 %v2260, 7
        %v2262 = vsub.s32 %v2259, %v2261
        %v2263 = vrot.slane %v2249, %v2262
        %v2264 = vcombine.low %v2239, %v2247
        %v2265 = vcombine.high %v2239, %v2247
        %v2267 = vunpack.c.l.s4 1934713408
        %v2268 = vunpack.c.0.s8 %v2267
        %v2269 = vlaneseq
        %v2270 = vshrl.u32 %v2269, 7
        %v2271 = vsub.s32 %v2268, %v2270
        %v2272 = vrot.slane %v2264, %v2271
        %v2274 = vunpack.c.l.s4 1934713408
        %v2275 = vunpack.c.0.s8 %v2274
        %v2276 = vlaneseq
        %v2277 = vshrl.u32 %v2276, 7
        %v2278 = vsub.s32 %v2275, %v2277
        %v2279 = vrot.slane %v2265, %v2278
        %v2280 = vcombine.low %v2256, %v2272
        %v2281 = vcombine.high %v2256, %v2272
        %v2282 = vcombine.low %v2263, %v2279
        %v2283 = vcombine.high %v2263, %v2279
        %v2284 = vcombine.low %v1980, %v1982
        %v2286 = vunpack.c.l.s4 1983009808
        %v2287 = vunpack.c.0.s8 %v2286
        %v2288 = vlaneseq
        %v2289 = vshrl.u32 %v2288, 7
        %v2290 = vsub.s32 %v2287, %v2289
        %v2291 = vrot.slane %v2284, %v2290
        %v2292 = vcombine.low %v1981, %v1983
        %v2294 = vunpack.c.l.s4 1983009808
        %v2295 = vunpack.c.0.s8 %v2294
        %v2296 = vlaneseq
        %v2297 = vshrl.u32 %v2296, 7
        %v2298 = vsub.s32 %v2295, %v2297
        %v2299 = vrot.slane %v2292, %v2298
        %v2300 = vcombine.low %v1984, %v1986
        %v2302 = vunpack.c.l.s4 1983009808
        %v2303 = vunpack.c.0.s8 %v2302
        %v2304 = vlaneseq
        %v2305 = vshrl.u32 %v2304, 7
        %v2306 = vsub.s32 %v2303, %v2305
        %v2307 = vrot.slane %v2300, %v2306
        %v2308 = vcombine.low %v1985, %v1987
        %v2310 = vunpack.c.l.s4 1983009808
        %v2311 = vunpack.c.0.s8 %v2310
        %v2312 = vlaneseq
        %v2313 = vshrl.u32 %v2312, 7
        %v2314 = vsub.s32 %v2311, %v2313
        %v2315 = vrot.slane %v2308, %v2314
        %v2316 = vcombine.low %v2291, %v2299
        %v2317 = vcombine.high %v2291, %v2299
        %v2319 = vunpack.c.l.s4 1934713408
        %v2320 = vunpack.c.0.s8 %v2319
        %v2321 = vlaneseq
        %v2322 = vshrl.u32 %v2321, 7
        %v2323 = vsub.s32 %v2320, %v2322
        %v2324 = vrot.slane %v2316, %v2323
        %v2326 = vunpack.c.l.s4 1934713408
        %v2327 = vunpack.c.0.s8 %v2326
        %v2328 = vlaneseq
        %v2329 = vshrl.u32 %v2328, 7
        %v2330 = vsub.s32 %v2327, %v2329
        %v2331 = vrot.slane %v2317, %v2330
        %v2332 = vcombine.low %v2307, %v2315
        %v2333 = vcombine.high %v2307, %v2315
        %v2335 = vunpack.c.l.s4 1934713408
        %v2336 = vunpack.c.0.s8 %v2335
        %v2337 = vlaneseq
        %v2338 = vshrl.u32 %v2337, 7
        %v2339 = vsub.s32 %v2336, %v2338
        %v2340 = vrot.slane %v2332, %v2339
        %v2342 = vunpack.c.l.s4 1934713408
        %v2343 = vunpack.c.0.s8 %v2342
        %v2344 = vlaneseq
        %v2345 = vshrl.u32 %v2344, 7
        %v2346 = vsub.s32 %v2343, %v2345
        %v2347 = vrot.slane %v2333, %v2346
        %v2348 = vcombine.low %v2324, %v2340
        %v2349 = vcombine.high %v2324, %v2340
        %v2350 = vcombine.low %v2331, %v2347
        %v2351 = vcombine.high %v2331, %v2347
        %v2352 = vcombine.low %v1988, %v1990
        %v2354 = vunpack.c.l.s4 1983009808
        %v2355 = vunpack.c.0.s8 %v2354
        %v2356 = vlaneseq
        %v2357 = vshrl.u32 %v2356, 7
        %v2358 = vsub.s32 %v2355, %v2357
        %v2359 = vrot.slane %v2352, %v2358
        %v2360 = vcombine.low %v1989, %v1991
        %v2362 = vunpack.c.l.s4 1983009808
        %v2363 = vunpack.c.0.s8 %v2362
        %v2364 = vlaneseq
        %v2365 = vshrl.u32 %v2364, 7
        %v2366 = vsub.s32 %v2363, %v2365
        %v2367 = vrot.slane %v2360, %v2366
        %v2368 = vcombine.low %v1992, %v1994
        %v2370 = vunpack.c.l.s4 1983009808
        %v2371 = vunpack.c.0.s8 %v2370
        %v2372 = vlaneseq
        %v2373 = vshrl.u32 %v2372, 7
        %v2374 = vsub.s32 %v2371, %v2373
        %v2375 = vrot.slane %v2368, %v2374
        %v2376 = vcombine.low %v1993, %v1995
        %v2378 = vunpack.c.l.s4 1983009808
        %v2379 = vunpack.c.0.s8 %v2378
        %v2380 = vlaneseq
        %v2381 = vshrl.u32 %v2380, 7
        %v2382 = vsub.s32 %v2379, %v2381
        %v2383 = vrot.slane %v2376, %v2382
        %v2384 = vcombine.low %v2359, %v2367
        %v2385 = vcombine.high %v2359, %v2367
        %v2387 = vunpack.c.l.s4 1934713408
        %v2388 = vunpack.c.0.s8 %v2387
        %v2389 = vlaneseq
        %v2390 = vshrl.u32 %v2389, 7
        %v2391 = vsub.s32 %v2388, %v2390
        %v2392 = vrot.slane %v2384, %v2391
        %v2394 = vunpack.c.l.s4 1934713408
        %v2395 = vunpack.c.0.s8 %v2394
        %v2396 = vlaneseq
        %v2397 = vshrl.u32 %v2396, 7
        %v2398 = vsub.s32 %v2395, %v2397
        %v2399 = vrot.slane %v2385, %v2398
        %v2400 = vcombine.low %v2375, %v2383
        %v2401 = vcombine.high %v2375, %v2383
        %v2403 = vunpack.c.l.s4 1934713408
        %v2404 = vunpack.c.0.s8 %v2403
        %v2405 = vlaneseq
        %v2406 = vshrl.u32 %v2405, 7
        %v2407 = vsub.s32 %v2404, %v2406
        %v2408 = vrot.slane %v2400, %v2407
        %v2410 = vunpack.c.l.s4 1934713408
        %v2411 = vunpack.c.0.s8 %v2410
        %v2412 = vlaneseq
        %v2413 = vshrl.u32 %v2412, 7
        %v2414 = vsub.s32 %v2411, %v2413
        %v2415 = vrot.slane %v2401, %v2414
        %v2416 = vcombine.low %v2392, %v2408
        %v2417 = vcombine.high %v2392, %v2408
        %v2418 = vcombine.low %v2399, %v2415
        %v2419 = vcombine.high %v2399, %v2415
        %v2420 = vcombine.low %v1996, %v1998
        %v2422 = vunpack.c.l.s4 1983009808
        %v2423 = vunpack.c.0.s8 %v2422
        %v2424 = vlaneseq
        %v2425 = vshrl.u32 %v2424, 7
        %v2426 = vsub.s32 %v2423, %v2425
        %v2427 = vrot.slane %v2420, %v2426
        %v2428 = vcombine.low %v1997, %v1999
        %v2430 = vunpack.c.l.s4 1983009808
        %v2431 = vunpack.c.0.s8 %v2430
        %v2432 = vlaneseq
        %v2433 = vshrl.u32 %v2432, 7
        %v2434 = vsub.s32 %v2431, %v2433
        %v2435 = vrot.slane %v2428, %v2434
        %v2436 = vcombine.low %v2000, %v2002
        %v2438 = vunpack.c.l.s4 1983009808
        %v2439 = vunpack.c.0.s8 %v2438
        %v2440 = vlaneseq
        %v2441 = vshrl.u32 %v2440, 7
        %v2442 = vsub.s32 %v2439, %v2441
        %v2443 = vrot.slane %v2436, %v2442
        %v2444 = vcombine.low %v2001, %v2003
        %v2446 = vunpack.c.l.s4 1983009808
        %v2447 = vunpack.c.0.s8 %v2446
        %v2448 = vlaneseq
        %v2449 = vshrl.u32 %v2448, 7
        %v2450 = vsub.s32 %v2447, %v2449
        %v2451 = vrot.slane %v2444, %v2450
        %v2452 = vcombine.low %v2427, %v2435
        %v2453 = vcombine.high %v2427, %v2435
        %v2455 = vunpack.c.l.s4 1934713408
        %v2456 = vunpack.c.0.s8 %v2455
        %v2457 = vlaneseq
        %v2458 = vshrl.u32 %v2457, 7
        %v2459 = vsub.s32 %v2456, %v2458
        %v2460 = vrot.slane %v2452, %v2459
        %v2462 = vunpack.c.l.s4 1934713408
        %v2463 = vunpack.c.0.s8 %v2462
        %v2464 = vlaneseq
        %v2465 = vshrl.u32 %v2464, 7
        %v2466 = vsub.s32 %v2463, %v2465
        %v2467 = vrot.slane %v2453, %v2466
        %v2468 = vcombine.low %v2443, %v2451
        %v2469 = vcombine.high %v2443, %v2451
        %v2471 = vunpack.c.l.s4 1934713408
        %v2472 = vunpack.c.0.s8 %v2471
        %v2473 = vlaneseq
        %v2474 = vshrl.u32 %v2473, 7
        %v2475 = vsub.s32 %v2472, %v2474
        %v2476 = vrot.slane %v2468, %v2475
        %v2478 = vunpack.c.l.s4 1934713408
        %v2479 = vunpack.c.0.s8 %v2478
        %v2480 = vlaneseq
        %v2481 = vshrl.u32 %v2480, 7
        %v2482 = vsub.s32 %v2479, %v2481
        %v2483 = vrot.slane %v2469, %v2482
        %v2484 = vcombine.low %v2460, %v2476
        %v2485 = vcombine.high %v2460, %v2476
        %v2486 = vcombine.low %v2467, %v2483
        %v2487 = vcombine.high %v2467, %v2483
        %v2488 = vcombine.low %v2004, %v2006
        %v2490 = vunpack.c.l.s4 1983009808
        %v2491 = vunpack.c.0.s8 %v2490
        %v2492 = vlaneseq
        %v2493 = vshrl.u32 %v2492, 7
        %v2494 = vsub.s32 %v2491, %v2493
        %v2495 = vrot.slane %v2488, %v2494
        %v2496 = vcombine.low %v2005, %v2007
        %v2498 = vunpack.c.l.s4 1983009808
        %v2499 = vunpack.c.0.s8 %v2498
        %v2500 = vlaneseq
        %v2501 = vshrl.u32 %v2500, 7
        %v2502 = vsub.s32 %v2499, %v2501
        %v2503 = vrot.slane %v2496, %v2502
        %v2504 = vcombine.low %v2008, %v2010
        %v2506 = vunpack.c.l.s4 1983009808
        %v2507 = vunpack.c.0.s8 %v2506
        %v2508 = vlaneseq
        %v2509 = vshrl.u32 %v2508, 7
        %v2510 = vsub.s32 %v2507, %v2509
        %v2511 = vrot.slane %v2504, %v2510
        %v2512 = vcombine.low %v2009, %v2011
        %v2514 = vunpack.c.l.s4 1983009808
        %v2515 = vunpack.c.0.s8 %v2514
        %v2516 = vlaneseq
        %v2517 = vshrl.u32 %v2516, 7
        %v2518 = vsub.s32 %v2515, %v2517
        %v2519 = vrot.slane %v2512, %v2518
        %v2520 = vcombine.low %v2495, %v2503
        %v2521 = vcombine.high %v2495, %v2503
        %v2523 = vunpack.c.l.s4 1934713408
        %v2524 = vunpack.c.0.s8 %v2523
        %v2525 = vlaneseq
        %v2526 = vshrl.u32 %v2525, 7
        %v2527 = vsub.s32 %v2524, %v2526
        %v2528 = vrot.slane %v2520, %v2527
        %v2530 = vunpack.c.l.s4 1934713408
        %v2531 = vunpack.c.0.s8 %v2530
        %v2532 = vlaneseq
        %v2533 = vshrl.u32 %v2532, 7
        %v2534 = vsub.s32 %v2531, %v2533
        %v2535 = vrot.slane %v2521, %v2534
        %v2536 = vcombine.low %v2511, %v2519
        %v2537 = vcombine.high %v2511, %v2519
        %v2539 = vunpack.c.l.s4 1934713408
        %v2540 = vunpack.c.0.s8 %v2539
        %v2541 = vlaneseq
        %v2542 = vshrl.u32 %v2541, 7
        %v2543 = vsub.s32 %v2540, %v2542
        %v2544 = vrot.slane %v2536, %v2543
        %v2546 = vunpack.c.l.s4 1934713408
        %v2547 = vunpack.c.0.s8 %v2546
        %v2548 = vlaneseq
        %v2549 = vshrl.u32 %v2548, 7
        %v2550 = vsub.s32 %v2547, %v2549
        %v2551 = vrot.slane %v2537, %v2550
        %v2552 = vcombine.low %v2528, %v2544
        %v2553 = vcombine.high %v2528, %v2544
        %v2554 = vcombine.low %v2535, %v2551
        %v2555 = vcombine.high %v2535, %v2551
        %2564 = vrot.lane.b32.xlu0 %v2077, 32
        %v2565 = vpop.permute.xlu0 %2564
        %2566 = vrot.lane.b32.xlu0 %v2145, 32
        %v2567 = vpop.permute.xlu0 %2566
        %2568 = vrot.lane.b32.xlu0 %v2213, 32
        %v2569 = vpop.permute.xlu0 %2568
        %2570 = vrot.lane.b32.xlu0 %v2281, 32
        %v2571 = vpop.permute.xlu0 %2570
        %2572 = vrot.lane.b32.xlu0 %v2349, 32
        %v2573 = vpop.permute.xlu0 %2572
        %2574 = vrot.lane.b32.xlu0 %v2417, 32
        %v2575 = vpop.permute.xlu0 %2574
        %2576 = vrot.lane.b32.xlu0 %v2485, 32
        %v2577 = vpop.permute.xlu0 %2576
        %2578 = vrot.lane.b32.xlu0 %v2553, 32
        %v2579 = vpop.permute.xlu0 %2578
        %2596 = vrot.lane.b32.xlu0 %v2078, 64
        %v2597 = vpop.permute.xlu0 %2596
        %2598 = vrot.lane.b32.xlu0 %v2146, 64
        %v2599 = vpop.permute.xlu0 %2598
        %2600 = vrot.lane.b32.xlu0 %v2214, 64
        %v2601 = vpop.permute.xlu0 %2600
        %2602 = vrot.lane.b32.xlu0 %v2282, 64
        %v2603 = vpop.permute.xlu0 %2602
        %2604 = vrot.lane.b32.xlu0 %v2350, 64
        %v2605 = vpop.permute.xlu0 %2604
        %2606 = vrot.lane.b32.xlu0 %v2418, 64
        %v2607 = vpop.permute.xlu0 %2606
        %2608 = vrot.lane.b32.xlu0 %v2486, 64
        %v2609 = vpop.permute.xlu0 %2608
        %2610 = vrot.lane.b32.xlu0 %v2554, 64
        %v2611 = vpop.permute.xlu0 %2610
        %2628 = vrot.lane.b32.xlu0 %v2079, 96
        %v2629 = vpop.permute.xlu0 %2628
        %2630 = vrot.lane.b32.xlu0 %v2147, 96
        %v2631 = vpop.permute.xlu0 %2630
        %2632 = vrot.lane.b32.xlu0 %v2215, 96
        %v2633 = vpop.permute.xlu0 %2632
        %2634 = vrot.lane.b32.xlu0 %v2283, 96
        %v2635 = vpop.permute.xlu0 %2634
        %2636 = vrot.lane.b32.xlu0 %v2351, 96
        %v2637 = vpop.permute.xlu0 %2636
        %2638 = vrot.lane.b32.xlu0 %v2419, 96
        %v2639 = vpop.permute.xlu0 %2638
        %2640 = vrot.lane.b32.xlu0 %v2487, 96
        %v2641 = vpop.permute.xlu0 %2640
        %2642 = vrot.lane.b32.xlu0 %v2555, 96
        %v2643 = vpop.permute.xlu0 %2642
        %v2652 = vsel %vm310, %v2076, %v2565
        %v2653 = vsel %vm310, %v2144, %v2567
        %v2654 = vsel %vm310, %v2212, %v2569
        %v2655 = vsel %vm310, %v2280, %v2571
        %v2656 = vsel %vm310, %v2348, %v2573
        %v2657 = vsel %vm310, %v2416, %v2575
        %v2658 = vsel %vm310, %v2484, %v2577
        %v2659 = vsel %vm310, %v2552, %v2579
        %vm2660 = vcmask 523264
        %v2661 = vsel %vm2660, %v2652, %v2597
        %v2662 = vsel %vm2660, %v2653, %v2599
        %v2663 = vsel %vm2660, %v2654, %v2601
        %v2664 = vsel %vm2660, %v2655, %v2603
        %v2665 = vsel %vm2660, %v2656, %v2605
        %v2666 = vsel %vm2660, %v2657, %v2607
        %v2667 = vsel %vm2660, %v2658, %v2609
        %v2668 = vsel %vm2660, %v2659, %v2611
        %vm2669 = vcmask 785408
        %v2670 = vsel %vm2669, %v2661, %v2629
        %v2671 = vsel %vm2669, %v2662, %v2631
        %v2672 = vsel %vm2669, %v2663, %v2633
        %v2673 = vsel %vm2669, %v2664, %v2635
        %v2674 = vsel %vm2669, %v2665, %v2637
        %v2675 = vsel %vm2669, %v2666, %v2639
        %v2676 = vsel %vm2669, %v2667, %v2641
        %v2677 = vsel %vm2669, %v2668, %v2643
        %v2678 = vpack.c.bf16 %v2670, %v2670
        %v2679 = vpack.c.bf16 %v2671, %v2671
        %v2680 = vpack.c.bf16 %v2672, %v2672
        %v2681 = vpack.c.bf16 %v2673, %v2673
        %v2682 = vpack.c.bf16 %v2674, %v2674
        %v2683 = vpack.c.bf16 %v2675, %v2675
        %v2684 = vpack.c.bf16 %v2676, %v2676
        %v2685 = vpack.c.bf16 %v2677, %v2677
        %2686 = vst [vmem:[%s224] sm:$0xf] %v2678
        %2687 = vst [vmem:[%s224 + $0x4] sm:$0xf] %v2679
        %2688 = vst [vmem:[%s224 + $0x8] sm:$0xf] %v2680
        %2689 = vst [vmem:[%s224 + $0xc] sm:$0xf] %v2681
        %2690 = vst [vmem:[%s224 + $0x10] sm:$0xf] %v2682
        %2691 = vst [vmem:[%s224 + $0x14] sm:$0xf] %v2683
        %2692 = vst [vmem:[%s224 + $0x18] sm:$0xf] %v2684
        %2693 = vst [vmem:[%s224 + $0x1c] sm:$0xf] %v2685
        %s2694 = sand.u32 %s140, 1
        %s2695 = scalar_lea.sflag [#allocation3], %s2694
        %s2696 = sand.u32 %s140, 1
        %s2697 = smul.addr %s2696, 32
        %s2698 = scalar_lea.vmem [#allocation2], %s2697
        // Predicated region
        $region37: #{tpu_custom_call.1} parent=35 // pred_check
          %p2699 = pneg %p150
        $region38: #{tpu_custom_call.1} parent=35 // pred_check_branch
          %2701 = sbr.rel (%p2699) target = $region40
        $region39: #{tpu_custom_call.1} parent=35 // pred_region
          %s2702 = smul.u32 8, %s24
          %s2704 = ssub.s32 512, 512
          %2705 = vsyncadd %s2695, %s2704
          %s2706 = smul.addr %s2702, 4
          %s2707 = sadd.s32 %s25, %s2706
          %s2708 = smul.addr %s23, 32
          %s2709 = sadd.s32 %s2707, %s2708
          %s2710 = smul.addr %s2709, 64
          %s2711 = scalar_lea.hbm %s4, %s2710
          %s2712 = sshll.u32 %s2698, 4
          %s2713 = int_to_ptr.vmem [resolvable:$true] %s2712
          %2718 = dma.vmem_to_hbm [thread:$0]  %s2713, 512, %s2711, %s2695, 64, 256, 4
        $region40: #{tpu_custom_call.1} parent=35 // pred_fallthru
          _
      $region36: #{tpu_custom_call.1} parent=5 // pred_fallthru
        _
      %p2719 = scmp.le.s32.totalorder 2, %s13
      // Predicated region
      $region41: #{tpu_custom_call.1} parent=5 // pred_check
        %p2720 = pneg %p2719
      $region42: #{tpu_custom_call.1} parent=5 // pred_check_branch
        %2722 = sbr.rel (%p2720) target = $region44
      $region43: #{tpu_custom_call.1} parent=5 // pred_region
        %s2723 = ssub.s32 %s13, 2
        // Predicated region
        $region45: #{tpu_custom_call.1} parent=43 // pred_check
          %p2724 = pneg %p156
        $region46: #{tpu_custom_call.1} parent=43 // pred_check_branch
          %2726 = sbr.rel (%p2724) target = $region48
        $region47: #{tpu_custom_call.1} parent=43 // pred_region
          %s2727 = sand.u32 %s141, 1
          %s2728 = scalar_lea.sflag [#allocation3], %s2727
          %s2729 = sand.u32 %s141, 1
          %s2730 = smul.addr %s2729, 32
          %s2731 = scalar_lea.vmem [#allocation2], %s2730
          %2732 = dma.done %s2728, 512
        $region48: #{tpu_custom_call.1} parent=43 // pred_fallthru
          _
      $region44: #{tpu_custom_call.1} parent=5 // pred_fallthru
        _
    $region6: #{tpu_custom_call.1} parent=1 // loop_footer
      %s17 = sadd.s32 1, %s13
    $region7: #{tpu_custom_call.1} parent=1 // loop_footer_branch
      %12 = sbr.rel target = $region3
    $region8: #{tpu_custom_call.1} parent=1 // loop_exit
      _
    %2733 = vsyncpa [#allocation3], 1
    %s2734 = scalar_lea.sflag [#allocation3], 1
    %2735 = vsyncpa %s2734, 1

</llo_original>
